<compile_context>
chip_gen: v5e
topology: v5e:2x2
jax: 0.10.0
libtpu: 0.0.40
codegen_flags: <defaults>
</compile_context>

<pallas_src>
import functools
import math

import jax
import jax.numpy as jnp
from jax.experimental import pallas as pl
from jax.experimental.pallas import tpu as pltpu

MATMUL_DTYPE = jnp.bfloat16   # MXU operand dtype; accumulation is always f32

CFG = dict(vocab=100, type_vocab=2, max_pos=16, hidden=32, heads=4,
           layers=2, ffn=64, output_dim=128)


# ----------------------------------------------------------------------------- #
# In-kernel helpers
# ----------------------------------------------------------------------------- #
def _ln(x, g, b, eps=1e-12):
    mu = jnp.mean(x, axis=-1, keepdims=True)
    xc = x - mu
    var = jnp.mean(xc * xc, axis=-1, keepdims=True)
    return xc * jax.lax.rsqrt(var + eps) * g + b


# ----------------------------------------------------------------------------- #
# The single fused encoder kernel
#   grid = (batch_blocks, num_layers), dimension_semantics = ("parallel",
#   "arbitrary").  Activation is resident in VMEM scratch across all layers.
# ----------------------------------------------------------------------------- #
def _encoder_kernel(x_emb_ref, maskb_ref, emb_g_ref, emb_b_ref,
                    wqkv_ref, bqkv_ref, wo_ref, bo_ref,
                    ln1_g_ref, ln1_b_ref, w1_ref, b1_ref, w2_ref, b2_ref,
                    ln2_g_ref, ln2_b_ref,
                    pool_w_ref, pool_b_ref, fc_w_ref, fc_b_ref,
                    o_ref,
                    x_scr, ctx_scr,
                    *, num_heads, head_dim, seq_len, batch_block):
    l = pl.program_id(1)
    n_layers = pl.num_programs(1)
    H = num_heads * head_dim
    S = seq_len
    BB = batch_block
    R = BB * S                       # rows of the activation slab (batch folded in)
    cdt = MATMUL_DTYPE

    # --- l == 0: load this batch block's embeddings + embedding LayerNorm ------
    @pl.when(l == 0)
    def _():
        emb = x_emb_ref[...].reshape(R, H)
        x_scr[...] = _ln(emb, emb_g_ref[...], emb_b_ref[...])

    x = x_scr[...]                   # (R, H) f32, VMEM-resident across layers

    # --- fused QKV projection: one MXU call over the whole (R, H) slab ---------
    # 1/sqrt(head_dim) is pre-folded into the Q columns of wqkv/bqkv at init.
    qkv = (jnp.dot(x.astype(cdt), wqkv_ref[0],
                   preferred_element_type=jnp.float32) + bqkv_ref[0])   # (R, 3H)

    bias = maskb_ref[...]            # (BB, 1, S) additive mask bias (precomputed)

    # --- attention: per head (static unroll), batched over the batch dim with
    #     leading-batch 3-D dots; ctx written directly into scratch (no concat) -
    for h in range(num_heads):
        lo = h * head_dim
        q_h = qkv[:, lo:lo + head_dim].reshape(BB, S, head_dim)
        k_h = qkv[:, H + lo:H + lo + head_dim].reshape(BB, S, head_dim)
        v_h = qkv[:, 2 * H + lo:2 * H + lo + head_dim].reshape(BB, S, head_dim)
        s = jnp.einsum('bqd,bkd->bqk', q_h, k_h,
                       preferred_element_type=jnp.float32) + bias       # (BB,S,S)
        s = s - jnp.max(s, axis=-1, keepdims=True)
        p = jnp.exp(s)
        p = p / jnp.sum(p, axis=-1, keepdims=True)
        ctx_h = jnp.einsum('bqk,bkd->bqd', p, v_h,
                           preferred_element_type=jnp.float32)
        ctx_scr[:, lo:lo + head_dim] = ctx_h.reshape(R, head_dim)

    # --- attention output projection + residual + LayerNorm --------------------
    attn = (jnp.dot(ctx_scr[...].astype(cdt), wo_ref[0],
                    preferred_element_type=jnp.float32) + bo_ref[0])
    x1 = _ln(x + attn, ln1_g_ref[0], ln1_b_ref[0])

    # --- FFN (GELU) + residual + LayerNorm --------------------------------------
    # TODO(synk): HF BERT uses exact erf GELU; tanh approximation kept for
    # guaranteed Mosaic lowering (tiny numerical deviation).
    hmid = (jnp.dot(x1.astype(cdt), w1_ref[0],
                    preferred_element_type=jnp.float32) + b1_ref[0])
    hmid = jax.nn.gelu(hmid, approximate=True)
    ffn = (jnp.dot(hmid.astype(cdt), w2_ref[0],
                   preferred_element_type=jnp.float32) + b2_ref[0])
    x2 = _ln(x1 + ffn, ln2_g_ref[0], ln2_b_ref[0])
    x_scr[...] = x2

    # --- l == L-1: fused head = pooler tanh(Linear(CLS)) -> fc -> L2 normalize -
    @pl.when(l == n_layers - 1)
    def _():
        cls = x2.reshape(BB, S, H)[:, 0, :]                              # (BB, H)
        pooled = jnp.tanh(jnp.dot(cls.astype(cdt), pool_w_ref[...],
                                  preferred_element_type=jnp.float32)
                          + pool_b_ref[...])
        # TODO(synk): dropout(p=0.2) after the pooler omitted (eval-mode identity).
        y = (jnp.dot(pooled.astype(cdt), fc_w_ref[...],
                     preferred_element_type=jnp.float32) + fc_b_ref[...])
        ssq = jnp.sum(y * y, axis=-1, keepdims=True)
        o_ref[0] = (y * jax.lax.rsqrt(jnp.maximum(ssq, 1e-24))).astype(o_ref.dtype)


def encoder_forward(params, x_emb, mask_bias, cfg, num_batch_blocks=None):
    B, S, H = x_emb.shape
    L = params["wqkv"].shape[0]
    nH = cfg["heads"]
    F = params["w1"].shape[-1]
    D = params["fc_w"].shape[-1]

    # 2-way batch split exposes both TensorCores on v7x (harmless on v5e/v6e).
    nb = num_batch_blocks if num_batch_blocks is not None else (2 if B % 2 == 0 else 1)
    assert B % nb == 0
    bb = B // nb

    def stk(s1, s2):   # per-layer stacked tensor: block (1, s1, s2), index (l, 0, 0)
        return pl.BlockSpec((1, s1, s2), lambda i, l: (l, 0, 0))

    def cst(shape):    # layer-invariant tensor, loaded once and kept resident
        return pl.BlockSpec(shape, lambda i, l: (0,) * len(shape))

    kernel = functools.partial(_encoder_kernel,
                               num_heads=nH, head_dim=H // nH,
                               seq_len=S, batch_block=bb)

    out = pl.pallas_call(
        kernel,
        out_shape=jax.ShapeDtypeStruct((nb, bb, D), jnp.float32),
        grid=(nb, L),
        in_specs=[
            pl.BlockSpec((bb, S, H), lambda i, l: (i, 0, 0)),    # embeddings
            pl.BlockSpec((bb, 1, S), lambda i, l: (i, 0, 0)),    # mask bias
            cst((1, H)), cst((1, H)),                            # embedding LN
            stk(H, 3 * H), stk(1, 3 * H),                        # wqkv, bqkv
            stk(H, H), stk(1, H),                                # wo, bo
            stk(1, H), stk(1, H),                                # ln1 g, b
            stk(H, F), stk(1, F),                                # w1, b1
            stk(F, H), stk(1, H),                                # w2, b2
            stk(1, H), stk(1, H),                                # ln2 g, b
            cst((H, H)), cst((1, H)),                            # pooler w, b
            cst((H, D)), cst((1, D)),                            # fc w, b
        ],
        out_specs=pl.BlockSpec((1, bb, D), lambda i, l: (i, 0, 0)),
        scratch_shapes=[pltpu.VMEM((bb * S, H), jnp.float32),    # resident activation
                        pltpu.VMEM((bb * S, H), jnp.float32)],   # attention ctx
        compiler_params=pltpu.CompilerParams(
            dimension_semantics=("parallel", "arbitrary")),
    )(x_emb, mask_bias,
      params["emb_ln_g"], params["emb_ln_b"],
      params["wqkv"], params["bqkv"], params["wo"], params["bo"],
      params["ln1_g"], params["ln1_b"],
      params["w1"], params["b1"], params["w2"], params["b2"],
      params["ln2_g"], params["ln2_b"],
      params["pool_w"], params["pool_b"], params["fc_w"], params["fc_b"])
    return out.reshape(B, D)


# ----------------------------------------------------------------------------- #
# Parameters (deterministic synthetic init, per-layer tensors stacked on L)
# ----------------------------------------------------------------------------- #
def init_params(key, cfg):
    H, F, D, L = cfg["hidden"], cfg["ffn"], cfg["output_dim"], cfg["layers"]
    nH = cfg["heads"]
    scale = 1.0 / math.sqrt(H // nH)

    def nrm(k, shape):
        return 0.02 * jax.random.normal(k, shape, dtype=jnp.float32)

    keys = iter(jax.random.split(key, 16))

    wqkv = nrm(next(keys), (L, H, 3 * H))
    # Fold the 1/sqrt(head_dim) attention scale into the Q columns (once, at init).
    wqkv = wqkv.at[:, :, :H].multiply(scale)

    return dict(
        word_emb=nrm(next(keys), (cfg["vocab"], H)),
        pos_emb=nrm(next(keys), (cfg["max_pos"], H)),
        type_emb=nrm(next(keys), (cfg["type_vocab"], H)),
        emb_ln_g=jnp.ones((1, H), jnp.float32),
        emb_ln_b=jnp.zeros((1, H), jnp.float32),
        wqkv=wqkv.astype(MATMUL_DTYPE),
        bqkv=jnp.zeros((L, 1, 3 * H), jnp.float32),   # zero bias: scale fold is a no-op
        wo=nrm(next(keys), (L, H, H)).astype(MATMUL_DTYPE),
        bo=jnp.zeros((L, 1, H), jnp.float32),
        ln1_g=jnp.ones((L, 1, H), jnp.float32),
        ln1_b=jnp.zeros((L, 1, H), jnp.float32),
        w1=nrm(next(keys), (L, H, F)).astype(MATMUL_DTYPE),
        b1=jnp.zeros((L, 1, F), jnp.float32),
        w2=nrm(next(keys), (L, F, H)).astype(MATMUL_DTYPE),
        b2=jnp.zeros((L, 1, H), jnp.float32),
        ln2_g=jnp.ones((L, 1, H), jnp.float32),
        ln2_b=jnp.zeros((L, 1, H), jnp.float32),
        pool_w=nrm(next(keys), (H, H)).astype(MATMUL_DTYPE),
        pool_b=jnp.zeros((1, H), jnp.float32),
        fc_w=nrm(next(keys), (H, D)).astype(MATMUL_DTYPE),
        fc_b=jnp.zeros((1, D), jnp.float32),
    )


# ----------------------------------------------------------------------------- #
# Forward pass (embedding gathers stay in plain JAX; everything else is one
# Pallas launch).
# ----------------------------------------------------------------------------- #
def text_backbone_forward(params, input_ids, attention_mask, token_type_ids, cfg=CFG):
    B, S = input_ids.shape
    assert S <= cfg["max_pos"], "sequence length exceeds positional table"

    # Embedding lookups (gather) kept as XLA glue — no clean Pallas gather at
    # this scale.
    emb = (jnp.take(params["word_emb"], input_ids, axis=0)
           + params["pos_emb"][None, :S, :]
           + jnp.take(params["type_emb"], token_type_ids, axis=0)).astype(jnp.float32)

    # Additive attention-mask bias precomputed once (not rebuilt per grid step).
    mask_bias = ((1.0 - attention_mask.astype(jnp.float32)) * (-1e9)).reshape(B, 1, S)

    return encoder_forward(params, emb, mask_bias, cfg)


# ----------------------------------------------------------------------------- #
if __name__ == "__main__":
    B, S = 2, 8
    key = jax.random.PRNGKey(0)
    k_param, k_ids = jax.random.split(key, 2)

    params = init_params(k_param, CFG)
    input_ids = jax.random.randint(k_ids, (B, S), 1, CFG["vocab"], dtype=jnp.int32)
    attention_mask = jnp.ones((B, S), jnp.int32).at[1, 6:].set(0)   # pad tail of sample 1
    token_type_ids = jnp.zeros((B, S), jnp.int32).at[:, 4:].set(1)

    out = text_backbone_forward(params, input_ids, attention_mask, token_type_ids)
    out = jax.block_until_ready(out)

    assert out.shape == (B, CFG["output_dim"])
    assert bool(jnp.all(jnp.isfinite(out)))
    # rows are L2-normalized
    assert bool(jnp.allclose(jnp.linalg.norm(out, axis=-1), 1.0, atol=1e-3))
    print("KERNEL_OK")
</pallas_src>

<mosaic_0001>
module attributes {stable_mosaic.version = 11 : i64} {
  func.func @_encoder_kernel(%arg0: i32, %arg1: i32, %arg2: memref<1x8x32xf32, #tpu.memory_space<vmem>>, %arg3: memref<1x1x8xf32, #tpu.memory_space<vmem>>, %arg4: memref<1x32xf32, #tpu.memory_space<vmem>>, %arg5: memref<1x32xf32, #tpu.memory_space<vmem>>, %arg6: memref<1x32x96xbf16, #tpu.memory_space<vmem>>, %arg7: memref<1x1x96xf32, #tpu.memory_space<vmem>>, %arg8: memref<1x32x32xbf16, #tpu.memory_space<vmem>>, %arg9: memref<1x1x32xf32, #tpu.memory_space<vmem>>, %arg10: memref<1x1x32xf32, #tpu.memory_space<vmem>>, %arg11: memref<1x1x32xf32, #tpu.memory_space<vmem>>, %arg12: memref<1x32x64xbf16, #tpu.memory_space<vmem>>, %arg13: memref<1x1x64xf32, #tpu.memory_space<vmem>>, %arg14: memref<1x64x32xbf16, #tpu.memory_space<vmem>>, %arg15: memref<1x1x32xf32, #tpu.memory_space<vmem>>, %arg16: memref<1x1x32xf32, #tpu.memory_space<vmem>>, %arg17: memref<1x1x32xf32, #tpu.memory_space<vmem>>, %arg18: memref<32x32xbf16, #tpu.memory_space<vmem>>, %arg19: memref<1x32xf32, #tpu.memory_space<vmem>>, %arg20: memref<32x128xbf16, #tpu.memory_space<vmem>>, %arg21: memref<1x128xf32, #tpu.memory_space<vmem>>, %arg22: memref<1x1x128xf32, #tpu.memory_space<vmem>>, %arg23: memref<8x32xf32, #tpu.memory_space<vmem>>, %arg24: memref<8x32xf32, #tpu.memory_space<vmem>>) attributes {dimension_semantics = [#tpu.dimension_semantics<parallel>, #tpu.dimension_semantics<arbitrary>], iteration_bounds = array<i64: 2, 2>, scalar_prefetch = 0 : i64, scratch_operands = 2 : i64, tpu.core_type = #tpu.core_type<tc>, window_params = [{transform_indices = @transform_0, window_bounds = array<i64: 1, 8, 32>}, {transform_indices = @transform_1, window_bounds = array<i64: 1, 1, 8>}, {pipeline_mode = #tpu.pipeline_mode<synchronous>, transform_indices = @transform_2, window_bounds = array<i64: 1, 32>}, {pipeline_mode = #tpu.pipeline_mode<synchronous>, transform_indices = @transform_3, window_bounds = array<i64: 1, 32>}, {transform_indices = @transform_4, window_bounds = array<i64: 1, 32, 96>}, {transform_indices = @transform_5, window_bounds = array<i64: 1, 1, 96>}, {transform_indices = @transform_6, window_bounds = array<i64: 1, 32, 32>}, {transform_indices = @transform_7, window_bounds = array<i64: 1, 1, 32>}, {transform_indices = @transform_8, window_bounds = array<i64: 1, 1, 32>}, {transform_indices = @transform_9, window_bounds = array<i64: 1, 1, 32>}, {transform_indices = @transform_10, window_bounds = array<i64: 1, 32, 64>}, {transform_indices = @transform_11, window_bounds = array<i64: 1, 1, 64>}, {transform_indices = @transform_12, window_bounds = array<i64: 1, 64, 32>}, {transform_indices = @transform_13, window_bounds = array<i64: 1, 1, 32>}, {transform_indices = @transform_14, window_bounds = array<i64: 1, 1, 32>}, {transform_indices = @transform_15, window_bounds = array<i64: 1, 1, 32>}, {pipeline_mode = #tpu.pipeline_mode<synchronous>, transform_indices = @transform_16, window_bounds = array<i64: 32, 32>}, {pipeline_mode = #tpu.pipeline_mode<synchronous>, transform_indices = @transform_17, window_bounds = array<i64: 1, 32>}, {pipeline_mode = #tpu.pipeline_mode<synchronous>, transform_indices = @transform_18, window_bounds = array<i64: 32, 128>}, {pipeline_mode = #tpu.pipeline_mode<synchronous>, transform_indices = @transform_19, window_bounds = array<i64: 1, 128>}, {transform_indices = @transform_20, window_bounds = array<i64: 1, 1, 128>}]} {
    %c0_i32 = arith.constant 0 : i32
    %0 = arith.cmpi eq, %arg1, %c0_i32 : i32
    %1 = arith.extui %0 : i1 to i32
    %c0_i32_0 = arith.constant 0 : i32
    %2 = arith.cmpi ne, %1, %c0_i32_0 : i32
    scf.if %2 {
      %c0_84 = arith.constant 0 : index
      %c0_85 = arith.constant 0 : index
      %c0_86 = arith.constant 0 : index
      %189 = vector.load %arg2[%c0_84, %c0_85, %c0_86] : memref<1x8x32xf32, #tpu.memory_space<vmem>>, vector<1x8x32xf32>
      %190 = vector.shape_cast %189 : vector<1x8x32xf32> to vector<8x32xf32>
      %c0_87 = arith.constant 0 : index
      %c0_88 = arith.constant 0 : index
      %191 = vector.load %arg4[%c0_87, %c0_88] : memref<1x32xf32, #tpu.memory_space<vmem>>, vector<1x32xf32>
      %c0_89 = arith.constant 0 : index
      %c0_90 = arith.constant 0 : index
      %192 = vector.load %arg5[%c0_89, %c0_90] : memref<1x32xf32, #tpu.memory_space<vmem>>, vector<1x32xf32>
      %cst_91 = arith.constant dense<0.000000e+00> : vector<8xf32>
      %193 = vector.multi_reduction <add>, %190, %cst_91 [1] : vector<8x32xf32> to vector<8xf32>
      %194 = vector.shape_cast %193 : vector<8xf32> to vector<8x1xf32>
      %cst_92 = arith.constant 3.200000e+01 : f32
      %195 = vector.broadcast %cst_92 : f32 to vector<8x1xf32>
      %196 = arith.divf %194, %195 : vector<8x1xf32>
      %197 = vector.broadcast %196 : vector<8x1xf32> to vector<8x32xf32>
      %198 = arith.subf %190, %197 : vector<8x32xf32>
      %199 = arith.mulf %198, %198 : vector<8x32xf32>
      %cst_93 = arith.constant dense<0.000000e+00> : vector<8xf32>
      %200 = vector.multi_reduction <add>, %199, %cst_93 [1] : vector<8x32xf32> to vector<8xf32>
      %201 = vector.shape_cast %200 : vector<8xf32> to vector<8x1xf32>
      %cst_94 = arith.constant 3.200000e+01 : f32
      %202 = vector.broadcast %cst_94 : f32 to vector<8x1xf32>
      %203 = arith.divf %201, %202 : vector<8x1xf32>
      %cst_95 = arith.constant 9.99999996E-13 : f32
      %204 = vector.broadcast %cst_95 : f32 to vector<8x1xf32>
      %205 = arith.addf %203, %204 : vector<8x1xf32>
      %206 = math.rsqrt %205 : vector<8x1xf32>
      %207 = vector.broadcast %206 : vector<8x1xf32> to vector<8x32xf32>
      %208 = arith.mulf %198, %207 : vector<8x32xf32>
      %209 = vector.broadcast %191 : vector<1x32xf32> to vector<8x32xf32>
      %210 = arith.mulf %208, %209 : vector<8x32xf32>
      %211 = vector.broadcast %192 : vector<1x32xf32> to vector<8x32xf32>
      %212 = arith.addf %210, %211 : vector<8x32xf32>
      %c0_96 = arith.constant 0 : index
      %c0_97 = arith.constant 0 : index
      %213 = vector.load %arg23[%c0_96, %c0_97] : memref<8x32xf32, #tpu.memory_space<vmem>>, vector<8x32xf32>
      tpu.vector_store %arg23[%c0_96, %c0_97], %212 {strides = array<i32>} : memref<8x32xf32, #tpu.memory_space<vmem>>, vector<8x32xf32>,
    } else {
    }
    %c0 = arith.constant 0 : index
    %c0_1 = arith.constant 0 : index
    %3 = vector.load %arg23[%c0, %c0_1] : memref<8x32xf32, #tpu.memory_space<vmem>>, vector<8x32xf32>
    %4 = arith.truncf %3 : vector<8x32xf32> to vector<8x32xbf16>
    %c0_2 = arith.constant 0 : index
    %c0_3 = arith.constant 0 : index
    %c0_4 = arith.constant 0 : index
    %5 = vector.load %arg6[%c0_2, %c0_3, %c0_4] : memref<1x32x96xbf16, #tpu.memory_space<vmem>>, vector<1x32x96xbf16>
    %6 = vector.shape_cast %5 : vector<1x32x96xbf16> to vector<32x96xbf16>
    %cst = arith.constant dense<0.000000e+00> : vector<8x96xf32>
    %7 = tpu.matmul %4, %6, %cst {dimension_numbers = #tpu.dot_dimension_numbers<[1], [0], [0], [1], [0, 0, 1, 1], [], []>} : vector<8x32xbf16>, vector<32x96xbf16>, vector<8x96xf32> -> vector<8x96xf32>
    %c0_5 = arith.constant 0 : index
    %c0_6 = arith.constant 0 : index
    %c0_7 = arith.constant 0 : index
    %8 = vector.load %arg7[%c0_5, %c0_6, %c0_7] : memref<1x1x96xf32, #tpu.memory_space<vmem>>, vector<1x1x96xf32>
    %9 = vector.shape_cast %8 : vector<1x1x96xf32> to vector<1x96xf32>
    %10 = vector.broadcast %9 : vector<1x96xf32> to vector<8x96xf32>
    %11 = arith.addf %7, %10 : vector<8x96xf32>
    %c0_8 = arith.constant 0 : index
    %c0_9 = arith.constant 0 : index
    %c0_10 = arith.constant 0 : index
    %12 = vector.load %arg3[%c0_8, %c0_9, %c0_10] : memref<1x1x8xf32, #tpu.memory_space<vmem>>, vector<1x1x8xf32>
    %13 = vector.extract_strided_slice %11 {offsets = [0, 0], sizes = [8, 8], strides = [1, 1]} : vector<8x96xf32> to vector<8x8xf32>
    %14 = vector.shape_cast %13 : vector<8x8xf32> to vector<1x8x8xf32>
    %15 = vector.extract_strided_slice %11 {offsets = [0, 32], sizes = [8, 8], strides = [1, 1]} : vector<8x96xf32> to vector<8x8xf32>
    %16 = vector.shape_cast %15 : vector<8x8xf32> to vector<1x8x8xf32>
    %17 = vector.extract_strided_slice %11 {offsets = [0, 64], sizes = [8, 8], strides = [1, 1]} : vector<8x96xf32> to vector<8x8xf32>
    %18 = vector.shape_cast %17 : vector<8x8xf32> to vector<1x8x8xf32>
    "tpu.trace_start"() <{level = 10 : i32, message = "bqd,bkd->bqk"}> : () -> ()
    %cst_11 = arith.constant dense<0.000000e+00> : vector<1x8x8xf32>
    %19 = tpu.matmul %14, %16, %cst_11 {dimension_numbers = #tpu.dot_dimension_numbers<[2], [2], [1], [1], [0, 0, 0, 1, 1, 1], [0], [0]>} : vector<1x8x8xf32>, vector<1x8x8xf32>, vector<1x8x8xf32> -> vector<1x8x8xf32>
    "tpu.trace_stop"() : () -> ()
    %20 = vector.broadcast %12 : vector<1x1x8xf32> to vector<1x8x8xf32>
    %21 = arith.addf %19, %20 : vector<1x8x8xf32>
    %cst_12 = arith.constant dense<0xFF800000> : vector<1x8xf32>
    %22 = vector.multi_reduction <maximumf>, %21, %cst_12 [2] : vector<1x8x8xf32> to vector<1x8xf32>
    %23 = vector.shape_cast %22 : vector<1x8xf32> to vector<1x8x1xf32>
    %24 = vector.broadcast %23 : vector<1x8x1xf32> to vector<1x8x8xf32>
    %25 = arith.subf %21, %24 : vector<1x8x8xf32>
    %26 = math.exp %25 : vector<1x8x8xf32>
    %cst_13 = arith.constant dense<0.000000e+00> : vector<1x8xf32>
    %27 = vector.multi_reduction <add>, %26, %cst_13 [2] : vector<1x8x8xf32> to vector<1x8xf32>
    %28 = vector.shape_cast %27 : vector<1x8xf32> to vector<1x8x1xf32>
    %29 = vector.broadcast %28 : vector<1x8x1xf32> to vector<1x8x8xf32>
    %30 = arith.divf %26, %29 : vector<1x8x8xf32>
    "tpu.trace_start"() <{level = 10 : i32, message = "bqk,bkd->bqd"}> : () -> ()
    %cst_14 = arith.constant dense<0.000000e+00> : vector<1x8x8xf32>
    %31 = tpu.matmul %30, %18, %cst_14 {dimension_numbers = #tpu.dot_dimension_numbers<[2], [1], [1], [2], [0, 0, 0, 1, 1, 2], [0], [0]>} : vector<1x8x8xf32>, vector<1x8x8xf32>, vector<1x8x8xf32> -> vector<1x8x8xf32>
    "tpu.trace_stop"() : () -> ()
    %32 = vector.shape_cast %31 : vector<1x8x8xf32> to vector<8x8xf32>
    %c0_15 = arith.constant 0 : index
    %c0_16 = arith.constant 0 : index
    %33 = vector.load %arg24[%c0_15, %c0_16] : memref<8x32xf32, #tpu.memory_space<vmem>>, vector<8x8xf32>
    tpu.vector_store %arg24[%c0_15, %c0_16], %32 {strides = array<i32>} : memref<8x32xf32, #tpu.memory_space<vmem>>, vector<8x8xf32>,
    %34 = vector.extract_strided_slice %11 {offsets = [0, 8], sizes = [8, 8], strides = [1, 1]} : vector<8x96xf32> to vector<8x8xf32>
    %35 = vector.shape_cast %34 : vector<8x8xf32> to vector<1x8x8xf32>
    %36 = vector.extract_strided_slice %11 {offsets = [0, 40], sizes = [8, 8], strides = [1, 1]} : vector<8x96xf32> to vector<8x8xf32>
    %37 = vector.shape_cast %36 : vector<8x8xf32> to vector<1x8x8xf32>
    %38 = vector.extract_strided_slice %11 {offsets = [0, 72], sizes = [8, 8], strides = [1, 1]} : vector<8x96xf32> to vector<8x8xf32>
    %39 = vector.shape_cast %38 : vector<8x8xf32> to vector<1x8x8xf32>
    "tpu.trace_start"() <{level = 10 : i32, message = "bqd,bkd->bqk"}> : () -> ()
    %cst_17 = arith.constant dense<0.000000e+00> : vector<1x8x8xf32>
    %40 = tpu.matmul %35, %37, %cst_17 {dimension_numbers = #tpu.dot_dimension_numbers<[2], [2], [1], [1], [0, 0, 0, 1, 1, 1], [0], [0]>} : vector<1x8x8xf32>, vector<1x8x8xf32>, vector<1x8x8xf32> -> vector<1x8x8xf32>
    "tpu.trace_stop"() : () -> ()
    %41 = vector.broadcast %12 : vector<1x1x8xf32> to vector<1x8x8xf32>
    %42 = arith.addf %40, %41 : vector<1x8x8xf32>
    %cst_18 = arith.constant dense<0xFF800000> : vector<1x8xf32>
    %43 = vector.multi_reduction <maximumf>, %42, %cst_18 [2] : vector<1x8x8xf32> to vector<1x8xf32>
    %44 = vector.shape_cast %43 : vector<1x8xf32> to vector<1x8x1xf32>
    %45 = vector.broadcast %44 : vector<1x8x1xf32> to vector<1x8x8xf32>
    %46 = arith.subf %42, %45 : vector<1x8x8xf32>
    %47 = math.exp %46 : vector<1x8x8xf32>
    %cst_19 = arith.constant dense<0.000000e+00> : vector<1x8xf32>
    %48 = vector.multi_reduction <add>, %47, %cst_19 [2] : vector<1x8x8xf32> to vector<1x8xf32>
    %49 = vector.shape_cast %48 : vector<1x8xf32> to vector<1x8x1xf32>
    %50 = vector.broadcast %49 : vector<1x8x1xf32> to vector<1x8x8xf32>
    %51 = arith.divf %47, %50 : vector<1x8x8xf32>
    "tpu.trace_start"() <{level = 10 : i32, message = "bqk,bkd->bqd"}> : () -> ()
    %cst_20 = arith.constant dense<0.000000e+00> : vector<1x8x8xf32>
    %52 = tpu.matmul %51, %39, %cst_20 {dimension_numbers = #tpu.dot_dimension_numbers<[2], [1], [1], [2], [0, 0, 0, 1, 1, 2], [0], [0]>} : vector<1x8x8xf32>, vector<1x8x8xf32>, vector<1x8x8xf32> -> vector<1x8x8xf32>
    "tpu.trace_stop"() : () -> ()
    %53 = vector.shape_cast %52 : vector<1x8x8xf32> to vector<8x8xf32>
    %c0_21 = arith.constant 0 : index
    %c8 = arith.constant 8 : index
    %54 = vector.load %arg24[%c0_21, %c8] : memref<8x32xf32, #tpu.memory_space<vmem>>, vector<8x8xf32>
    tpu.vector_store %arg24[%c0_21, %c8], %53 {strides = array<i32>} : memref<8x32xf32, #tpu.memory_space<vmem>>, vector<8x8xf32>,
    %55 = vector.extract_strided_slice %11 {offsets = [0, 16], sizes = [8, 8], strides = [1, 1]} : vector<8x96xf32> to vector<8x8xf32>
    %56 = vector.shape_cast %55 : vector<8x8xf32> to vector<1x8x8xf32>
    %57 = vector.extract_strided_slice %11 {offsets = [0, 48], sizes = [8, 8], strides = [1, 1]} : vector<8x96xf32> to vector<8x8xf32>
    %58 = vector.shape_cast %57 : vector<8x8xf32> to vector<1x8x8xf32>
    %59 = vector.extract_strided_slice %11 {offsets = [0, 80], sizes = [8, 8], strides = [1, 1]} : vector<8x96xf32> to vector<8x8xf32>
    %60 = vector.shape_cast %59 : vector<8x8xf32> to vector<1x8x8xf32>
    "tpu.trace_start"() <{level = 10 : i32, message = "bqd,bkd->bqk"}> : () -> ()
    %cst_22 = arith.constant dense<0.000000e+00> : vector<1x8x8xf32>
    %61 = tpu.matmul %56, %58, %cst_22 {dimension_numbers = #tpu.dot_dimension_numbers<[2], [2], [1], [1], [0, 0, 0, 1, 1, 1], [0], [0]>} : vector<1x8x8xf32>, vector<1x8x8xf32>, vector<1x8x8xf32> -> vector<1x8x8xf32>
    "tpu.trace_stop"() : () -> ()
    %62 = vector.broadcast %12 : vector<1x1x8xf32> to vector<1x8x8xf32>
    %63 = arith.addf %61, %62 : vector<1x8x8xf32>
    %cst_23 = arith.constant dense<0xFF800000> : vector<1x8xf32>
    %64 = vector.multi_reduction <maximumf>, %63, %cst_23 [2] : vector<1x8x8xf32> to vector<1x8xf32>
    %65 = vector.shape_cast %64 : vector<1x8xf32> to vector<1x8x1xf32>
    %66 = vector.broadcast %65 : vector<1x8x1xf32> to vector<1x8x8xf32>
    %67 = arith.subf %63, %66 : vector<1x8x8xf32>
    %68 = math.exp %67 : vector<1x8x8xf32>
    %cst_24 = arith.constant dense<0.000000e+00> : vector<1x8xf32>
    %69 = vector.multi_reduction <add>, %68, %cst_24 [2] : vector<1x8x8xf32> to vector<1x8xf32>
    %70 = vector.shape_cast %69 : vector<1x8xf32> to vector<1x8x1xf32>
    %71 = vector.broadcast %70 : vector<1x8x1xf32> to vector<1x8x8xf32>
    %72 = arith.divf %68, %71 : vector<1x8x8xf32>
    "tpu.trace_start"() <{level = 10 : i32, message = "bqk,bkd->bqd"}> : () -> ()
    %cst_25 = arith.constant dense<0.000000e+00> : vector<1x8x8xf32>
    %73 = tpu.matmul %72, %60, %cst_25 {dimension_numbers = #tpu.dot_dimension_numbers<[2], [1], [1], [2], [0, 0, 0, 1, 1, 2], [0], [0]>} : vector<1x8x8xf32>, vector<1x8x8xf32>, vector<1x8x8xf32> -> vector<1x8x8xf32>
    "tpu.trace_stop"() : () -> ()
    %74 = vector.shape_cast %73 : vector<1x8x8xf32> to vector<8x8xf32>
    %c0_26 = arith.constant 0 : index
    %c16 = arith.constant 16 : index
    %75 = vector.load %arg24[%c0_26, %c16] : memref<8x32xf32, #tpu.memory_space<vmem>>, vector<8x8xf32>
    tpu.vector_store %arg24[%c0_26, %c16], %74 {strides = array<i32>} : memref<8x32xf32, #tpu.memory_space<vmem>>, vector<8x8xf32>,
    %76 = vector.extract_strided_slice %11 {offsets = [0, 24], sizes = [8, 8], strides = [1, 1]} : vector<8x96xf32> to vector<8x8xf32>
    %77 = vector.shape_cast %76 : vector<8x8xf32> to vector<1x8x8xf32>
    %78 = vector.extract_strided_slice %11 {offsets = [0, 56], sizes = [8, 8], strides = [1, 1]} : vector<8x96xf32> to vector<8x8xf32>
    %79 = vector.shape_cast %78 : vector<8x8xf32> to vector<1x8x8xf32>
    %80 = vector.extract_strided_slice %11 {offsets = [0, 88], sizes = [8, 8], strides = [1, 1]} : vector<8x96xf32> to vector<8x8xf32>
    %81 = vector.shape_cast %80 : vector<8x8xf32> to vector<1x8x8xf32>
    "tpu.trace_start"() <{level = 10 : i32, message = "bqd,bkd->bqk"}> : () -> ()
    %cst_27 = arith.constant dense<0.000000e+00> : vector<1x8x8xf32>
    %82 = tpu.matmul %77, %79, %cst_27 {dimension_numbers = #tpu.dot_dimension_numbers<[2], [2], [1], [1], [0, 0, 0, 1, 1, 1], [0], [0]>} : vector<1x8x8xf32>, vector<1x8x8xf32>, vector<1x8x8xf32> -> vector<1x8x8xf32>
    "tpu.trace_stop"() : () -> ()
    %83 = vector.broadcast %12 : vector<1x1x8xf32> to vector<1x8x8xf32>
    %84 = arith.addf %82, %83 : vector<1x8x8xf32>
    %cst_28 = arith.constant dense<0xFF800000> : vector<1x8xf32>
    %85 = vector.multi_reduction <maximumf>, %84, %cst_28 [2] : vector<1x8x8xf32> to vector<1x8xf32>
    %86 = vector.shape_cast %85 : vector<1x8xf32> to vector<1x8x1xf32>
    %87 = vector.broadcast %86 : vector<1x8x1xf32> to vector<1x8x8xf32>
    %88 = arith.subf %84, %87 : vector<1x8x8xf32>
    %89 = math.exp %88 : vector<1x8x8xf32>
    %cst_29 = arith.constant dense<0.000000e+00> : vector<1x8xf32>
    %90 = vector.multi_reduction <add>, %89, %cst_29 [2] : vector<1x8x8xf32> to vector<1x8xf32>
    %91 = vector.shape_cast %90 : vector<1x8xf32> to vector<1x8x1xf32>
    %92 = vector.broadcast %91 : vector<1x8x1xf32> to vector<1x8x8xf32>
    %93 = arith.divf %89, %92 : vector<1x8x8xf32>
    "tpu.trace_start"() <{level = 10 : i32, message = "bqk,bkd->bqd"}> : () -> ()
    %cst_30 = arith.constant dense<0.000000e+00> : vector<1x8x8xf32>
    %94 = tpu.matmul %93, %81, %cst_30 {dimension_numbers = #tpu.dot_dimension_numbers<[2], [1], [1], [2], [0, 0, 0, 1, 1, 2], [0], [0]>} : vector<1x8x8xf32>, vector<1x8x8xf32>, vector<1x8x8xf32> -> vector<1x8x8xf32>
    "tpu.trace_stop"() : () -> ()
    %95 = vector.shape_cast %94 : vector<1x8x8xf32> to vector<8x8xf32>
    %c0_31 = arith.constant 0 : index
    %c24 = arith.constant 24 : index
    %96 = vector.load %arg24[%c0_31, %c24] : memref<8x32xf32, #tpu.memory_space<vmem>>, vector<8x8xf32>
    tpu.vector_store %arg24[%c0_31, %c24], %95 {strides = array<i32>} : memref<8x32xf32, #tpu.memory_space<vmem>>, vector<8x8xf32>,
    %c0_32 = arith.constant 0 : index
    %c0_33 = arith.constant 0 : index
    %97 = vector.load %arg24[%c0_32, %c0_33] : memref<8x32xf32, #tpu.memory_space<vmem>>, vector<8x32xf32>
    %98 = arith.truncf %97 : vector<8x32xf32> to vector<8x32xbf16>
    %c0_34 = arith.constant 0 : index
    %c0_35 = arith.constant 0 : index
    %c0_36 = arith.constant 0 : index
    %99 = vector.load %arg8[%c0_34, %c0_35, %c0_36] : memref<1x32x32xbf16, #tpu.memory_space<vmem>>, vector<1x32x32xbf16>
    %100 = vector.shape_cast %99 : vector<1x32x32xbf16> to vector<32x32xbf16>
    %cst_37 = arith.constant dense<0.000000e+00> : vector<8x32xf32>
    %101 = tpu.matmul %98, %100, %cst_37 {dimension_numbers = #tpu.dot_dimension_numbers<[1], [0], [0], [1], [0, 0, 1, 1], [], []>} : vector<8x32xbf16>, vector<32x32xbf16>, vector<8x32xf32> -> vector<8x32xf32>
    %c0_38 = arith.constant 0 : index
    %c0_39 = arith.constant 0 : index
    %c0_40 = arith.constant 0 : index
    %102 = vector.load %arg9[%c0_38, %c0_39, %c0_40] : memref<1x1x32xf32, #tpu.memory_space<vmem>>, vector<1x1x32xf32>
    %103 = vector.shape_cast %102 : vector<1x1x32xf32> to vector<1x32xf32>
    %104 = vector.broadcast %103 : vector<1x32xf32> to vector<8x32xf32>
    %105 = arith.addf %101, %104 : vector<8x32xf32>
    %106 = arith.addf %3, %105 : vector<8x32xf32>
    %c0_41 = arith.constant 0 : index
    %c0_42 = arith.constant 0 : index
    %c0_43 = arith.constant 0 : index
    %107 = vector.load %arg10[%c0_41, %c0_42, %c0_43] : memref<1x1x32xf32, #tpu.memory_space<vmem>>, vector<1x1x32xf32>
    %108 = vector.shape_cast %107 : vector<1x1x32xf32> to vector<1x32xf32>
    %c0_44 = arith.constant 0 : index
    %c0_45 = arith.constant 0 : index
    %c0_46 = arith.constant 0 : index
    %109 = vector.load %arg11[%c0_44, %c0_45, %c0_46] : memref<1x1x32xf32, #tpu.memory_space<vmem>>, vector<1x1x32xf32>
    %110 = vector.shape_cast %109 : vector<1x1x32xf32> to vector<1x32xf32>
    %cst_47 = arith.constant dense<0.000000e+00> : vector<8xf32>
    %111 = vector.multi_reduction <add>, %106, %cst_47 [1] : vector<8x32xf32> to vector<8xf32>
    %112 = vector.shape_cast %111 : vector<8xf32> to vector<8x1xf32>
    %cst_48 = arith.constant 3.200000e+01 : f32
    %113 = vector.broadcast %cst_48 : f32 to vector<8x1xf32>
    %114 = arith.divf %112, %113 : vector<8x1xf32>
    %115 = vector.broadcast %114 : vector<8x1xf32> to vector<8x32xf32>
    %116 = arith.subf %106, %115 : vector<8x32xf32>
    %117 = arith.mulf %116, %116 : vector<8x32xf32>
    %cst_49 = arith.constant dense<0.000000e+00> : vector<8xf32>
    %118 = vector.multi_reduction <add>, %117, %cst_49 [1] : vector<8x32xf32> to vector<8xf32>
    %119 = vector.shape_cast %118 : vector<8xf32> to vector<8x1xf32>
    %cst_50 = arith.constant 3.200000e+01 : f32
    %120 = vector.broadcast %cst_50 : f32 to vector<8x1xf32>
    %121 = arith.divf %119, %120 : vector<8x1xf32>
    %cst_51 = arith.constant 9.99999996E-13 : f32
    %122 = vector.broadcast %cst_51 : f32 to vector<8x1xf32>
    %123 = arith.addf %121, %122 : vector<8x1xf32>
    %124 = math.rsqrt %123 : vector<8x1xf32>
    %125 = vector.broadcast %124 : vector<8x1xf32> to vector<8x32xf32>
    %126 = arith.mulf %116, %125 : vector<8x32xf32>
    %127 = vector.broadcast %108 : vector<1x32xf32> to vector<8x32xf32>
    %128 = arith.mulf %126, %127 : vector<8x32xf32>
    %129 = vector.broadcast %110 : vector<1x32xf32> to vector<8x32xf32>
    %130 = arith.addf %128, %129 : vector<8x32xf32>
    %131 = arith.truncf %130 : vector<8x32xf32> to vector<8x32xbf16>
    %c0_52 = arith.constant 0 : index
    %c0_53 = arith.constant 0 : index
    %c0_54 = arith.constant 0 : index
    %132 = vector.load %arg12[%c0_52, %c0_53, %c0_54] : memref<1x32x64xbf16, #tpu.memory_space<vmem>>, vector<1x32x64xbf16>
    %133 = vector.shape_cast %132 : vector<1x32x64xbf16> to vector<32x64xbf16>
    %cst_55 = arith.constant dense<0.000000e+00> : vector<8x64xf32>
    %134 = tpu.matmul %131, %133, %cst_55 {dimension_numbers = #tpu.dot_dimension_numbers<[1], [0], [0], [1], [0, 0, 1, 1], [], []>} : vector<8x32xbf16>, vector<32x64xbf16>, vector<8x64xf32> -> vector<8x64xf32>
    %c0_56 = arith.constant 0 : index
    %c0_57 = arith.constant 0 : index
    %c0_58 = arith.constant 0 : index
    %135 = vector.load %arg13[%c0_56, %c0_57, %c0_58] : memref<1x1x64xf32, #tpu.memory_space<vmem>>, vector<1x1x64xf32>
    %136 = vector.shape_cast %135 : vector<1x1x64xf32> to vector<1x64xf32>
    %137 = vector.broadcast %136 : vector<1x64xf32> to vector<8x64xf32>
    %138 = arith.addf %134, %137 : vector<8x64xf32>
    %139 = arith.mulf %138, %138 : vector<8x64xf32>
    %140 = arith.mulf %138, %139 : vector<8x64xf32>
    %cst_59 = arith.constant 4.471500e-02 : f32
    %141 = vector.broadcast %cst_59 : f32 to vector<8x64xf32>
    %142 = arith.mulf %141, %140 : vector<8x64xf32>
    %143 = arith.addf %138, %142 : vector<8x64xf32>
    %cst_60 = arith.constant 0.797884583 : f32
    %144 = vector.broadcast %cst_60 : f32 to vector<8x64xf32>
    %145 = arith.mulf %144, %143 : vector<8x64xf32>
    %146 = math.tanh %145 : vector<8x64xf32>
    %cst_61 = arith.constant 1.000000e+00 : f32
    %147 = vector.broadcast %cst_61 : f32 to vector<8x64xf32>
    %148 = arith.addf %147, %146 : vector<8x64xf32>
    %cst_62 = arith.constant 5.000000e-01 : f32
    %149 = vector.broadcast %cst_62 : f32 to vector<8x64xf32>
    %150 = arith.mulf %149, %148 : vector<8x64xf32>
    %151 = arith.mulf %138, %150 : vector<8x64xf32>
    %152 = arith.truncf %151 : vector<8x64xf32> to vector<8x64xbf16>
    %c0_63 = arith.constant 0 : index
    %c0_64 = arith.constant 0 : index
    %c0_65 = arith.constant 0 : index
    %153 = vector.load %arg14[%c0_63, %c0_64, %c0_65] : memref<1x64x32xbf16, #tpu.memory_space<vmem>>, vector<1x64x32xbf16>
    %154 = vector.shape_cast %153 : vector<1x64x32xbf16> to vector<64x32xbf16>
    %cst_66 = arith.constant dense<0.000000e+00> : vector<8x32xf32>
    %155 = tpu.matmul %152, %154, %cst_66 {dimension_numbers = #tpu.dot_dimension_numbers<[1], [0], [0], [1], [0, 0, 1, 1], [], []>} : vector<8x64xbf16>, vector<64x32xbf16>, vector<8x32xf32> -> vector<8x32xf32>
    %c0_67 = arith.constant 0 : index
    %c0_68 = arith.constant 0 : index
    %c0_69 = arith.constant 0 : index
    %156 = vector.load %arg15[%c0_67, %c0_68, %c0_69] : memref<1x1x32xf32, #tpu.memory_space<vmem>>, vector<1x1x32xf32>
    %157 = vector.shape_cast %156 : vector<1x1x32xf32> to vector<1x32xf32>
    %158 = vector.broadcast %157 : vector<1x32xf32> to vector<8x32xf32>
    %159 = arith.addf %155, %158 : vector<8x32xf32>
    %160 = arith.addf %130, %159 : vector<8x32xf32>
    %c0_70 = arith.constant 0 : index
    %c0_71 = arith.constant 0 : index
    %c0_72 = arith.constant 0 : index
    %161 = vector.load %arg16[%c0_70, %c0_71, %c0_72] : memref<1x1x32xf32, #tpu.memory_space<vmem>>, vector<1x1x32xf32>
    %162 = vector.shape_cast %161 : vector<1x1x32xf32> to vector<1x32xf32>
    %c0_73 = arith.constant 0 : index
    %c0_74 = arith.constant 0 : index
    %c0_75 = arith.constant 0 : index
    %163 = vector.load %arg17[%c0_73, %c0_74, %c0_75] : memref<1x1x32xf32, #tpu.memory_space<vmem>>, vector<1x1x32xf32>
    %164 = vector.shape_cast %163 : vector<1x1x32xf32> to vector<1x32xf32>
    %cst_76 = arith.constant dense<0.000000e+00> : vector<8xf32>
    %165 = vector.multi_reduction <add>, %160, %cst_76 [1] : vector<8x32xf32> to vector<8xf32>
    %166 = vector.shape_cast %165 : vector<8xf32> to vector<8x1xf32>
    %cst_77 = arith.constant 3.200000e+01 : f32
    %167 = vector.broadcast %cst_77 : f32 to vector<8x1xf32>
    %168 = arith.divf %166, %167 : vector<8x1xf32>
    %169 = vector.broadcast %168 : vector<8x1xf32> to vector<8x32xf32>
    %170 = arith.subf %160, %169 : vector<8x32xf32>
    %171 = arith.mulf %170, %170 : vector<8x32xf32>
    %cst_78 = arith.constant dense<0.000000e+00> : vector<8xf32>
    %172 = vector.multi_reduction <add>, %171, %cst_78 [1] : vector<8x32xf32> to vector<8xf32>
    %173 = vector.shape_cast %172 : vector<8xf32> to vector<8x1xf32>
    %cst_79 = arith.constant 3.200000e+01 : f32
    %174 = vector.broadcast %cst_79 : f32 to vector<8x1xf32>
    %175 = arith.divf %173, %174 : vector<8x1xf32>
    %cst_80 = arith.constant 9.99999996E-13 : f32
    %176 = vector.broadcast %cst_80 : f32 to vector<8x1xf32>
    %177 = arith.addf %175, %176 : vector<8x1xf32>
    %178 = math.rsqrt %177 : vector<8x1xf32>
    %179 = vector.broadcast %178 : vector<8x1xf32> to vector<8x32xf32>
    %180 = arith.mulf %170, %179 : vector<8x32xf32>
    %181 = vector.broadcast %162 : vector<1x32xf32> to vector<8x32xf32>
    %182 = arith.mulf %180, %181 : vector<8x32xf32>
    %183 = vector.broadcast %164 : vector<1x32xf32> to vector<8x32xf32>
    %184 = arith.addf %182, %183 : vector<8x32xf32>
    %c0_81 = arith.constant 0 : index
    %c0_82 = arith.constant 0 : index
    %185 = vector.load %arg23[%c0_81, %c0_82] : memref<8x32xf32, #tpu.memory_space<vmem>>, vector<8x32xf32>
    tpu.vector_store %arg23[%c0_81, %c0_82], %184 {strides = array<i32>} : memref<8x32xf32, #tpu.memory_space<vmem>>, vector<8x32xf32>,
    %c1_i32 = arith.constant 1 : i32
    %186 = arith.cmpi eq, %arg1, %c1_i32 : i32
    %187 = arith.extui %186 : i1 to i32
    %c0_i32_83 = arith.constant 0 : i32
    %188 = arith.cmpi ne, %187, %c0_i32_83 : i32
    scf.if %188 {
      %189 = vector.shape_cast %184 : vector<8x32xf32> to vector<1x8x32xf32>
      %190 = vector.extract_strided_slice %189 {offsets = [0, 0, 0], sizes = [1, 1, 32], strides = [1, 1, 1]} : vector<1x8x32xf32> to vector<1x1x32xf32>
      %191 = vector.shape_cast %190 : vector<1x1x32xf32> to vector<1x32xf32>
      %192 = arith.truncf %191 : vector<1x32xf32> to vector<1x32xbf16>
      %c0_84 = arith.constant 0 : index
      %c0_85 = arith.constant 0 : index
      %193 = vector.load %arg18[%c0_84, %c0_85] : memref<32x32xbf16, #tpu.memory_space<vmem>>, vector<32x32xbf16>
      %cst_86 = arith.constant dense<0.000000e+00> : vector<1x32xf32>
      %194 = tpu.matmul %192, %193, %cst_86 {dimension_numbers = #tpu.dot_dimension_numbers<[1], [0], [0], [1], [0, 0, 1, 1], [], []>} : vector<1x32xbf16>, vector<32x32xbf16>, vector<1x32xf32> -> vector<1x32xf32>
      %c0_87 = arith.constant 0 : index
      %c0_88 = arith.constant 0 : index
      %195 = vector.load %arg19[%c0_87, %c0_88] : memref<1x32xf32, #tpu.memory_space<vmem>>, vector<1x32xf32>
      %196 = arith.addf %194, %195 : vector<1x32xf32>
      %197 = math.tanh %196 : vector<1x32xf32>
      %198 = arith.truncf %197 : vector<1x32xf32> to vector<1x32xbf16>
      %c0_89 = arith.constant 0 : index
      %c0_90 = arith.constant 0 : index
      %199 = vector.load %arg20[%c0_89, %c0_90] : memref<32x128xbf16, #tpu.memory_space<vmem>>, vector<32x128xbf16>
      %cst_91 = arith.constant dense<0.000000e+00> : vector<1x128xf32>
      %200 = tpu.matmul %198, %199, %cst_91 {dimension_numbers = #tpu.dot_dimension_numbers<[1], [0], [0], [1], [0, 0, 1, 1], [], []>} : vector<1x32xbf16>, vector<32x128xbf16>, vector<1x128xf32> -> vector<1x128xf32>
      %c0_92 = arith.constant 0 : index
      %c0_93 = arith.constant 0 : index
      %201 = vector.load %arg21[%c0_92, %c0_93] : memref<1x128xf32, #tpu.memory_space<vmem>>, vector<1x128xf32>
      %202 = arith.addf %200, %201 : vector<1x128xf32>
      %203 = arith.mulf %202, %202 : vector<1x128xf32>
      %cst_94 = arith.constant dense<0.000000e+00> : vector<1xf32>
      %204 = vector.multi_reduction <add>, %203, %cst_94 [1] : vector<1x128xf32> to vector<1xf32>
      %205 = vector.shape_cast %204 : vector<1xf32> to vector<1x1xf32>
      %cst_95 = arith.constant 1.000000e-24 : f32
      %206 = vector.broadcast %cst_95 : f32 to vector<1x1xf32>
      %207 = arith.maximumf %205, %206 : vector<1x1xf32>
      %208 = math.rsqrt %207 : vector<1x1xf32>
      %209 = vector.broadcast %208 : vector<1x1xf32> to vector<1x128xf32>
      %210 = arith.mulf %202, %209 : vector<1x128xf32>
      %c0_96 = arith.constant 0 : index
      %c0_97 = arith.constant 0 : index
      %c0_98 = arith.constant 0 : index
      %211 = vector.load %arg22[%c0_96, %c0_97, %c0_98] : memref<1x1x128xf32, #tpu.memory_space<vmem>>, vector<1x1x128xf32>
      %212 = vector.shape_cast %211 : vector<1x1x128xf32> to vector<1x128xf32>
      %213 = vector.shape_cast %210 : vector<1x128xf32> to vector<1x1x128xf32>
      tpu.vector_store %arg22[%c0_96, %c0_97, %c0_98], %213 {strides = array<i32>} : memref<1x1x128xf32, #tpu.memory_space<vmem>>, vector<1x1x128xf32>,
    } else {
    }
    return
  }
  func.func @transform_0(%arg0: i32, %arg1: i32) -> (i32, i32, i32) {
    %c0_i32 = arith.constant 0 : i32
    %c0_i32_0 = arith.constant 0 : i32
    %c0_i32_1 = arith.constant 0 : i32
    return %arg0, %c0_i32, %c0_i32_0 : i32, i32, i32
  }
  func.func @transform_1(%arg0: i32, %arg1: i32) -> (i32, i32, i32) {
    %c0_i32 = arith.constant 0 : i32
    %c0_i32_0 = arith.constant 0 : i32
    %c0_i32_1 = arith.constant 0 : i32
    return %arg0, %c0_i32, %c0_i32_0 : i32, i32, i32
  }
  func.func @transform_2(%arg0: i32, %arg1: i32) -> (i32, i32) {
    %c0_i32 = arith.constant 0 : i32
    %c0_i32_0 = arith.constant 0 : i32
    %c0_i32_1 = arith.constant 0 : i32
    return %c0_i32, %c0_i32_0 : i32, i32
  }
  func.func @transform_3(%arg0: i32, %arg1: i32) -> (i32, i32) {
    %c0_i32 = arith.constant 0 : i32
    %c0_i32_0 = arith.constant 0 : i32
    %c0_i32_1 = arith.constant 0 : i32
    return %c0_i32, %c0_i32_0 : i32, i32
  }
  func.func @transform_4(%arg0: i32, %arg1: i32) -> (i32, i32, i32) {
    %c0_i32 = arith.constant 0 : i32
    %c0_i32_0 = arith.constant 0 : i32
    %c0_i32_1 = arith.constant 0 : i32
    return %arg1, %c0_i32, %c0_i32_0 : i32, i32, i32
  }
  func.func @transform_5(%arg0: i32, %arg1: i32) -> (i32, i32, i32) {
    %c0_i32 = arith.constant 0 : i32
    %c0_i32_0 = arith.constant 0 : i32
    %c0_i32_1 = arith.constant 0 : i32
    return %arg1, %c0_i32, %c0_i32_0 : i32, i32, i32
  }
  func.func @transform_6(%arg0: i32, %arg1: i32) -> (i32, i32, i32) {
    %c0_i32 = arith.constant 0 : i32
    %c0_i32_0 = arith.constant 0 : i32
    %c0_i32_1 = arith.constant 0 : i32
    return %arg1, %c0_i32, %c0_i32_0 : i32, i32, i32
  }
  func.func @transform_7(%arg0: i32, %arg1: i32) -> (i32, i32, i32) {
    %c0_i32 = arith.constant 0 : i32
    %c0_i32_0 = arith.constant 0 : i32
    %c0_i32_1 = arith.constant 0 : i32
    return %arg1, %c0_i32, %c0_i32_0 : i32, i32, i32
  }
  func.func @transform_8(%arg0: i32, %arg1: i32) -> (i32, i32, i32) {
    %c0_i32 = arith.constant 0 : i32
    %c0_i32_0 = arith.constant 0 : i32
    %c0_i32_1 = arith.constant 0 : i32
    return %arg1, %c0_i32, %c0_i32_0 : i32, i32, i32
  }
  func.func @transform_9(%arg0: i32, %arg1: i32) -> (i32, i32, i32) {
    %c0_i32 = arith.constant 0 : i32
    %c0_i32_0 = arith.constant 0 : i32
    %c0_i32_1 = arith.constant 0 : i32
    return %arg1, %c0_i32, %c0_i32_0 : i32, i32, i32
  }
  func.func @transform_10(%arg0: i32, %arg1: i32) -> (i32, i32, i32) {
    %c0_i32 = arith.constant 0 : i32
    %c0_i32_0 = arith.constant 0 : i32
    %c0_i32_1 = arith.constant 0 : i32
    return %arg1, %c0_i32, %c0_i32_0 : i32, i32, i32
  }
  func.func @transform_11(%arg0: i32, %arg1: i32) -> (i32, i32, i32) {
    %c0_i32 = arith.constant 0 : i32
    %c0_i32_0 = arith.constant 0 : i32
    %c0_i32_1 = arith.constant 0 : i32
    return %arg1, %c0_i32, %c0_i32_0 : i32, i32, i32
  }
  func.func @transform_12(%arg0: i32, %arg1: i32) -> (i32, i32, i32) {
    %c0_i32 = arith.constant 0 : i32
    %c0_i32_0 = arith.constant 0 : i32
    %c0_i32_1 = arith.constant 0 : i32
    return %arg1, %c0_i32, %c0_i32_0 : i32, i32, i32
  }
  func.func @transform_13(%arg0: i32, %arg1: i32) -> (i32, i32, i32) {
    %c0_i32 = arith.constant 0 : i32
    %c0_i32_0 = arith.constant 0 : i32
    %c0_i32_1 = arith.constant 0 : i32
    return %arg1, %c0_i32, %c0_i32_0 : i32, i32, i32
  }
  func.func @transform_14(%arg0: i32, %arg1: i32) -> (i32, i32, i32) {
    %c0_i32 = arith.constant 0 : i32
    %c0_i32_0 = arith.constant 0 : i32
    %c0_i32_1 = arith.constant 0 : i32
    return %arg1, %c0_i32, %c0_i32_0 : i32, i32, i32
  }
  func.func @transform_15(%arg0: i32, %arg1: i32) -> (i32, i32, i32) {
    %c0_i32 = arith.constant 0 : i32
    %c0_i32_0 = arith.constant 0 : i32
    %c0_i32_1 = arith.constant 0 : i32
    return %arg1, %c0_i32, %c0_i32_0 : i32, i32, i32
  }
  func.func @transform_16(%arg0: i32, %arg1: i32) -> (i32, i32) {
    %c0_i32 = arith.constant 0 : i32
    %c0_i32_0 = arith.constant 0 : i32
    %c0_i32_1 = arith.constant 0 : i32
    return %c0_i32, %c0_i32_0 : i32, i32
  }
  func.func @transform_17(%arg0: i32, %arg1: i32) -> (i32, i32) {
    %c0_i32 = arith.constant 0 : i32
    %c0_i32_0 = arith.constant 0 : i32
    %c0_i32_1 = arith.constant 0 : i32
    return %c0_i32, %c0_i32_0 : i32, i32
  }
  func.func @transform_18(%arg0: i32, %arg1: i32) -> (i32, i32) {
    %c0_i32 = arith.constant 0 : i32
    %c0_i32_0 = arith.constant 0 : i32
    %c0_i32_1 = arith.constant 0 : i32
    return %c0_i32, %c0_i32_0 : i32, i32
  }
  func.func @transform_19(%arg0: i32, %arg1: i32) -> (i32, i32) {
    %c0_i32 = arith.constant 0 : i32
    %c0_i32_0 = arith.constant 0 : i32
    %c0_i32_1 = arith.constant 0 : i32
    return %c0_i32, %c0_i32_0 : i32, i32
  }
  func.func @transform_20(%arg0: i32, %arg1: i32) -> (i32, i32, i32) {
    %c0_i32 = arith.constant 0 : i32
    %c0_i32_0 = arith.constant 0 : i32
    %c0_i32_1 = arith.constant 0 : i32
    return %arg0, %c0_i32, %c0_i32_0 : i32, i32, i32
  }
}

</mosaic_0001>

<llo_original>
// kernel: tpu_custom_call.1
$region0: #{tpu_custom_call.1}
  #allocation0 [shape = 'u32[]', space=smem, size = 0x4, offset = 0x4, fixed_abs, tag = 'smem constant byte address 0x4 - core index']
  #allocation1 [shape = 'u32[72,128]{1,0:T(1,128)}', space=vmem, size = 0x9000, scoped, tag = 'internal scratch']
  #allocation2 [shape = 'f32[8,32]{1,0:T(8,128)}', space=vmem, size = 0x1000, scoped, tag = 'scratch operand']
  #allocation3 [shape = 'f32[8,32]{1,0:T(8,128)}', space=vmem, size = 0x1000, scoped, tag = 'scratch operand']
  %s0 = inlined_call_operand.hbm [shape: f32[2,8,32], index: 0, kind: input, shape index: {}]
  %s1 = inlined_call_operand.hbm [shape: f32[2,1,8], index: 1, kind: input, shape index: {}]
  %s2 = inlined_call_operand.vmem [shape: f32[1,32], index: 2, kind: input, shape index: {}]
  %s3 = inlined_call_operand.hbm [shape: f32[1,32], index: 3, kind: input, shape index: {}]
  %s4 = inlined_call_operand.vmem [shape: bf16[2,32,96], index: 4, kind: input, shape index: {}]
  %s5 = inlined_call_operand.hbm [shape: f32[2,1,96], index: 5, kind: input, shape index: {}]
  %s6 = inlined_call_operand.vmem [shape: bf16[2,32,32], index: 6, kind: input, shape index: {}]
  %s7 = inlined_call_operand.hbm [shape: f32[2,1,32], index: 7, kind: input, shape index: {}]
  %s8 = inlined_call_operand.hbm [shape: f32[2,1,32], index: 8, kind: input, shape index: {}]
  %s9 = inlined_call_operand.hbm [shape: f32[2,1,32], index: 9, kind: input, shape index: {}]
  %s10 = inlined_call_operand.vmem [shape: bf16[2,32,64], index: 10, kind: input, shape index: {}]
  %s11 = inlined_call_operand.hbm [shape: f32[2,1,64], index: 11, kind: input, shape index: {}]
  %s12 = inlined_call_operand.vmem [shape: bf16[2,64,32], index: 12, kind: input, shape index: {}]
  %s13 = inlined_call_operand.hbm [shape: f32[2,1,32], index: 13, kind: input, shape index: {}]
  %s14 = inlined_call_operand.hbm [shape: f32[2,1,32], index: 14, kind: input, shape index: {}]
  %s15 = inlined_call_operand.hbm [shape: f32[2,1,32], index: 15, kind: input, shape index: {}]
  %s16 = inlined_call_operand.hbm [shape: bf16[32,32], index: 16, kind: input, shape index: {}]
  %s17 = inlined_call_operand.hbm [shape: f32[1,32], index: 17, kind: input, shape index: {}]
  %s18 = inlined_call_operand.vmem [shape: bf16[32,128], index: 18, kind: input, shape index: {}]
  %s19 = inlined_call_operand.hbm [shape: f32[1,128], index: 19, kind: input, shape index: {}]
  %s20 = inlined_call_operand.hbm [shape: f32[2,1,128], index: 20, kind: output, shape index: {}]
  %s21 = sld [smem:[#allocation0]]
  $region177: #{tpu_custom_call.1} parent=0
    _
  %s23 = ssub.s32 1, %s21
  %s24 = scalar_select 0, %s23, %s21
  $region1: #{tpu_custom_call.1} parent=0
    #allocation4 [shape = 'u8[8192]{0}', space=vmem, size = 0x2000, scoped, tag = 'input window, operand 0']
    #allocation5 [shape = 's32[2]{0}', space=sflag, size = 0x8, scoped, tag = 'scoped memory for tpu_custom_call.1']
    #allocation6 [shape = 's32[2]{0}', space=sflag, size = 0x8, scoped, tag = 'scoped memory for tpu_custom_call.1']
    #allocation7 [shape = 'u8[1024]{0}', space=vmem, size = 0x400, scoped, tag = 'input window, operand 1']
    #allocation8 [shape = 's32[2]{0}', space=sflag, size = 0x8, scoped, tag = 'scoped memory for tpu_custom_call.1']
    #allocation9 [shape = 'u8[512]{0}', space=vmem, size = 0x400, scoped, tag = 'input window, operand 3, single buffered']
    #allocation10 [shape = 'u8[1024]{0}', space=vmem, size = 0x400, scoped, tag = 'input window, operand 5']
    #allocation11 [shape = 's32[2]{0}', space=sflag, size = 0x8, scoped, tag = 'scoped memory for tpu_custom_call.1']
    #allocation12 [shape = 'u8[1024]{0}', space=vmem, size = 0x400, scoped, tag = 'input window, operand 7']
    #allocation13 [shape = 'u8[1024]{0}', space=vmem, size = 0x400, scoped, tag = 'input window, operand 8']
    #allocation14 [shape = 's32[2]{0}', space=sflag, size = 0x8, scoped, tag = 'scoped memory for tpu_custom_call.1']
    #allocation15 [shape = 'u8[1024]{0}', space=vmem, size = 0x400, scoped, tag = 'input window, operand 9']
    #allocation16 [shape = 'u8[1024]{0}', space=vmem, size = 0x400, scoped, tag = 'input window, operand 11']
    #allocation17 [shape = 's32[2]{0}', space=sflag, size = 0x8, scoped, tag = 'scoped memory for tpu_custom_call.1']
    #allocation18 [shape = 'u8[1024]{0}', space=vmem, size = 0x400, scoped, tag = 'input window, operand 13']
    #allocation19 [shape = 'u8[1024]{0}', space=vmem, size = 0x400, scoped, tag = 'input window, operand 14']
    #allocation20 [shape = 's32[2]{0}', space=sflag, size = 0x8, scoped, tag = 'scoped memory for tpu_custom_call.1']
    #allocation21 [shape = 'u8[1024]{0}', space=vmem, size = 0x400, scoped, tag = 'input window, operand 15']
    #allocation22 [shape = 'u8[8192]{0}', space=vmem, size = 0x2000, scoped, tag = 'input window, operand 16, single buffered']
    #allocation23 [shape = 's32[1]{0}', space=sflag, size = 0x4, scoped, tag = 'scoped memory for tpu_custom_call.1']
    #allocation24 [shape = 'u8[512]{0}', space=vmem, size = 0x400, scoped, tag = 'input window, operand 17, single buffered']
    #allocation25 [shape = 'u8[512]{0}', space=vmem, size = 0x400, scoped, tag = 'input window, operand 19, single buffered']
    #allocation26 [shape = 's32[1]{0}', space=sflag, size = 0x4, scoped, tag = 'scoped memory for tpu_custom_call.1']
    #allocation27 [shape = 'u8[1024]{0}', space=vmem, size = 0x400, scoped, tag = 'output window, operand 0']
    %25 = vsyncpa [#allocation5], 0
    %s26 = scalar_lea.sflag [#allocation5], 1
    %27 = vsyncpa %s26, 0
    %28 = vsyncpa [#allocation8], 0
    %s29 = scalar_lea.sflag [#allocation8], 1
    %30 = vsyncpa %s29, 0
    %31 = vsyncpa [#allocation11], 0
    %s32 = scalar_lea.sflag [#allocation11], 1
    %33 = vsyncpa %s32, 0
    %34 = vsyncpa [#allocation14], 0
    %s35 = scalar_lea.sflag [#allocation14], 1
    %36 = vsyncpa %s35, 0
    %37 = vsyncpa [#allocation17], 0
    %s38 = scalar_lea.sflag [#allocation17], 1
    %39 = vsyncpa %s38, 0
    %40 = vsyncpa [#allocation20], 0
    %s41 = scalar_lea.sflag [#allocation20], 1
    %42 = vsyncpa %s41, 0
    %43 = vsyncpa [#allocation23], 0
    %44 = vsyncpa [#allocation26], 0
    %45 = vsyncpa [#allocation6], 0
    %s46 = scalar_lea.sflag [#allocation6], 1
    %47 = vsyncpa %s46, 0
    loop: start=0, step=1, limit=6
    $region2: #{tpu_custom_call.1} parent=1 // loop_pre_header
      _
    $region3: #{tpu_custom_call.1} parent=1 // loop_header
      %s49 = sphi 0, %s53
      %p50 = scmp.ge.s32.totalorder %s49, 6
      %s56 = sphi 0, %s68
      %s57 = sphi 0, %s64
      %s58 = sphi 0, %s56
      %s59 = sphi 0, %s57
      %s60 = sphi 0, %s58
      %s61 = sphi 0, %s59
      %s71 = sphi 0, %s73
      %s74 = sphi 0, %s71
      %s75 = sphi 0, %s74
      %s91 = sphi 0, %s75
      %s97 = sphi 0, %s99
      %s100 = sphi 0, %s97
      %s101 = sphi 0, %s100
      %s117 = sphi 0, %s101
      %s121 = sphi 0, %s121
      %s123 = sphi 0, %s121
      %s124 = sphi 0, %s123
      %s138 = sphi 0, %s124
      %s142 = sphi 0, %s142
      %s144 = sphi 0, %s142
      %s145 = sphi 0, %s144
      %s159 = sphi 0, %s145
      %s165 = sphi 0, %s167
      %s168 = sphi 0, %s165
      %s169 = sphi 0, %s168
      %s185 = sphi 0, %s169
      %s191 = sphi 0, %s193
      %s194 = sphi 0, %s191
      %s195 = sphi 0, %s194
      %s211 = sphi 0, %s195
      %s217 = sphi 0, %s219
      %s220 = sphi 0, %s217
      %s221 = sphi 0, %s220
      %s237 = sphi 0, %s221
      %s243 = sphi 0, %s245
      %s246 = sphi 0, %s243
      %s247 = sphi 0, %s246
      %s263 = sphi 0, %s247
      %s269 = sphi 0, %s271
      %s272 = sphi 0, %s269
      %s273 = sphi 0, %s272
      %s289 = sphi 0, %s273
      %s295 = sphi 0, %s297
      %s298 = sphi 0, %s295
      %s299 = sphi 0, %s298
      %s315 = sphi 0, %s299
      %s321 = sphi 0, %s323
      %s324 = sphi 0, %s321
      %s325 = sphi 0, %s324
      %s341 = sphi 0, %s325
      %s347 = sphi 0, %s349
      %s350 = sphi 0, %s347
      %s351 = sphi 0, %s350
      %s367 = sphi 0, %s351
      %s373 = sphi 0, %s375
      %s376 = sphi 0, %s373
      %s377 = sphi 0, %s376
      %s393 = sphi 0, %s377
      %s399 = sphi 0, %s401
      %s402 = sphi 0, %s399
      %s403 = sphi 0, %s402
      %s419 = sphi 0, %s403
      %s425 = sphi 0, %s427
      %s428 = sphi 0, %s425
      %s429 = sphi 0, %s428
      %s445 = sphi 0, %s429
      %s451 = sphi 0, %s453
      %s454 = sphi 0, %s451
      %s455 = sphi 0, %s454
      %s471 = sphi 0, %s455
      %s475 = sphi 0, %s475
      %s477 = sphi 0, %s475
      %s478 = sphi 0, %s477
      %s492 = sphi 0, %s478
      %s496 = sphi 0, %s496
      %s498 = sphi 0, %s496
      %s499 = sphi 0, %s498
      %s513 = sphi 0, %s499
      %s517 = sphi 0, %s517
      %s519 = sphi 0, %s517
      %s520 = sphi 0, %s519
      %s534 = sphi 0, %s520
      %s538 = sphi 0, %s538
      %s540 = sphi 0, %s538
      %s541 = sphi 0, %s540
      %s555 = sphi 0, %s541
      %s561 = sphi 0, %s563
      %s564 = sphi 0, %s561
      %s565 = sphi 0, %s564
      %s581 = sphi 0, %s565
    $region4: #{tpu_custom_call.1} parent=1 // loop_header_branch
      %52 = sbr.rel (%p50) target = $region8
    $region5: #{tpu_custom_call.1} parent=1 // loop_body
      %s54 = ssub.s32 %s49, 1
      %s55 = ssub.s32 %s49, 2
      %s62 = sadd.s32 1, %s57
      %p63 = scmp.ge.s32.totalorder %s62, 2
      %s64 = scalar_select %p63, 0, %s62
      %s65 = sadd.s32 1, %s56
      %s66 = scalar_select %p63, %s65, %s56
      %p67 = scmp.ge.s32.totalorder %s66, 2
      %s68 = scalar_select %p67, 0, %s66
      %s69 = ssub.s32 %s56, %s68
      %p70 = scmp.eq.s32.totalorder %s69, 0
      %s72 = sadd.s32 %s71, 1
      %s73 = scalar_select %p70, %s71, %s72
      %p76 = pneg %p70
      %p77 = scmp.eq.s32.totalorder %s49, 3
      %p78 = por %p76, %p77
      %p79 = scmp.ne.s32.totalorder %s71, %s74
      %p80 = scmp.eq.s32.totalorder %s49, 0
      %p81 = por %p79, %p80
      %p82 = scmp.ne.s32.totalorder %s71, %s74
      %p83 = scmp.eq.s32.totalorder %s54, 3
      %p84 = por %p82, %p83
      %p85 = scmp.ne.s32.totalorder %s74, %s75
      %p86 = scmp.eq.s32.totalorder %s54, 0
      %p87 = por %p85, %p86
      %p88 = scmp.ne.s32.totalorder %s74, %s75
      %p89 = scmp.eq.s32.totalorder %s55, 3
      %p90 = por %p88, %p89
      %p92 = scmp.ne.s32.totalorder %s75, %s91
      %p93 = scmp.eq.s32.totalorder %s55, 0
      %p94 = por %p92, %p93
      %s95 = ssub.s32 %s56, %s68
      %p96 = scmp.eq.s32.totalorder %s95, 0
      %s98 = sadd.s32 %s97, 1
      %s99 = scalar_select %p96, %s97, %s98
      %p102 = pneg %p96
      %p103 = scmp.eq.s32.totalorder %s49, 3
      %p104 = por %p102, %p103
      %p105 = scmp.ne.s32.totalorder %s97, %s100
      %p106 = scmp.eq.s32.totalorder %s49, 0
      %p107 = por %p105, %p106
      %p108 = scmp.ne.s32.totalorder %s97, %s100
      %p109 = scmp.eq.s32.totalorder %s54, 3
      %p110 = por %p108, %p109
      %p111 = scmp.ne.s32.totalorder %s100, %s101
      %p112 = scmp.eq.s32.totalorder %s54, 0
      %p113 = por %p111, %p112
      %p114 = scmp.ne.s32.totalorder %s100, %s101
      %p115 = scmp.eq.s32.totalorder %s55, 3
      %p116 = por %p114, %p115
      %p118 = scmp.ne.s32.totalorder %s101, %s117
      %p119 = scmp.eq.s32.totalorder %s55, 0
      %p120 = por %p118, %p119
      %s122 = sadd.s32 %s121, 1
      %p125 = scmp.eq.s32.totalorder %s49, 3
      %p126 = scmp.ne.s32.totalorder %s121, %s123
      %p127 = scmp.eq.s32.totalorder %s49, 0
      %p128 = por %p126, %p127
      %p129 = scmp.ne.s32.totalorder %s121, %s123
      %p130 = scmp.eq.s32.totalorder %s54, 3
      %p131 = por %p129, %p130
      %p132 = scmp.ne.s32.totalorder %s123, %s124
      %p133 = scmp.eq.s32.totalorder %s54, 0
      %p134 = por %p132, %p133
      %p135 = scmp.ne.s32.totalorder %s123, %s124
      %p136 = scmp.eq.s32.totalorder %s55, 3
      %p137 = por %p135, %p136
      %p139 = scmp.ne.s32.totalorder %s124, %s138
      %p140 = scmp.eq.s32.totalorder %s55, 0
      %p141 = por %p139, %p140
      %s143 = sadd.s32 %s142, 1
      %p146 = scmp.eq.s32.totalorder %s49, 3
      %p147 = scmp.ne.s32.totalorder %s142, %s144
      %p148 = scmp.eq.s32.totalorder %s49, 0
      %p149 = por %p147, %p148
      %p150 = scmp.ne.s32.totalorder %s142, %s144
      %p151 = scmp.eq.s32.totalorder %s54, 3
      %p152 = por %p150, %p151
      %p153 = scmp.ne.s32.totalorder %s144, %s145
      %p154 = scmp.eq.s32.totalorder %s54, 0
      %p155 = por %p153, %p154
      %p156 = scmp.ne.s32.totalorder %s144, %s145
      %p157 = scmp.eq.s32.totalorder %s55, 3
      %p158 = por %p156, %p157
      %p160 = scmp.ne.s32.totalorder %s145, %s159
      %p161 = scmp.eq.s32.totalorder %s55, 0
      %p162 = por %p160, %p161
      %s163 = ssub.s32 %s57, %s64
      %p164 = scmp.eq.s32.totalorder %s163, 0
      %s166 = sadd.s32 %s165, 1
      %s167 = scalar_select %p164, %s165, %s166
      %p170 = pneg %p164
      %p171 = scmp.eq.s32.totalorder %s49, 3
      %p172 = por %p170, %p171
      %p173 = scmp.ne.s32.totalorder %s165, %s168
      %p174 = scmp.eq.s32.totalorder %s49, 0
      %p175 = por %p173, %p174
      %p176 = scmp.ne.s32.totalorder %s165, %s168
      %p177 = scmp.eq.s32.totalorder %s54, 3
      %p178 = por %p176, %p177
      %p179 = scmp.ne.s32.totalorder %s168, %s169
      %p180 = scmp.eq.s32.totalorder %s54, 0
      %p181 = por %p179, %p180
      %p182 = scmp.ne.s32.totalorder %s168, %s169
      %p183 = scmp.eq.s32.totalorder %s55, 3
      %p184 = por %p182, %p183
      %p186 = scmp.ne.s32.totalorder %s169, %s185
      %p187 = scmp.eq.s32.totalorder %s55, 0
      %p188 = por %p186, %p187
      %s189 = ssub.s32 %s57, %s64
      %p190 = scmp.eq.s32.totalorder %s189, 0
      %s192 = sadd.s32 %s191, 1
      %s193 = scalar_select %p190, %s191, %s192
      %p196 = pneg %p190
      %p197 = scmp.eq.s32.totalorder %s49, 3
      %p198 = por %p196, %p197
      %p199 = scmp.ne.s32.totalorder %s191, %s194
      %p200 = scmp.eq.s32.totalorder %s49, 0
      %p201 = por %p199, %p200
      %p202 = scmp.ne.s32.totalorder %s191, %s194
      %p203 = scmp.eq.s32.totalorder %s54, 3
      %p204 = por %p202, %p203
      %p205 = scmp.ne.s32.totalorder %s194, %s195
      %p206 = scmp.eq.s32.totalorder %s54, 0
      %p207 = por %p205, %p206
      %p208 = scmp.ne.s32.totalorder %s194, %s195
      %p209 = scmp.eq.s32.totalorder %s55, 3
      %p210 = por %p208, %p209
      %p212 = scmp.ne.s32.totalorder %s195, %s211
      %p213 = scmp.eq.s32.totalorder %s55, 0
      %p214 = por %p212, %p213
      %s215 = ssub.s32 %s57, %s64
      %p216 = scmp.eq.s32.totalorder %s215, 0
      %s218 = sadd.s32 %s217, 1
      %s219 = scalar_select %p216, %s217, %s218
      %p222 = pneg %p216
      %p223 = scmp.eq.s32.totalorder %s49, 3
      %p224 = por %p222, %p223
      %p225 = scmp.ne.s32.totalorder %s217, %s220
      %p226 = scmp.eq.s32.totalorder %s49, 0
      %p227 = por %p225, %p226
      %p228 = scmp.ne.s32.totalorder %s217, %s220
      %p229 = scmp.eq.s32.totalorder %s54, 3
      %p230 = por %p228, %p229
      %p231 = scmp.ne.s32.totalorder %s220, %s221
      %p232 = scmp.eq.s32.totalorder %s54, 0
      %p233 = por %p231, %p232
      %p234 = scmp.ne.s32.totalorder %s220, %s221
      %p235 = scmp.eq.s32.totalorder %s55, 3
      %p236 = por %p234, %p235
      %p238 = scmp.ne.s32.totalorder %s221, %s237
      %p239 = scmp.eq.s32.totalorder %s55, 0
      %p240 = por %p238, %p239
      %s241 = ssub.s32 %s57, %s64
      %p242 = scmp.eq.s32.totalorder %s241, 0
      %s244 = sadd.s32 %s243, 1
      %s245 = scalar_select %p242, %s243, %s244
      %p248 = pneg %p242
      %p249 = scmp.eq.s32.totalorder %s49, 3
      %p250 = por %p248, %p249
      %p251 = scmp.ne.s32.totalorder %s243, %s246
      %p252 = scmp.eq.s32.totalorder %s49, 0
      %p253 = por %p251, %p252
      %p254 = scmp.ne.s32.totalorder %s243, %s246
      %p255 = scmp.eq.s32.totalorder %s54, 3
      %p256 = por %p254, %p255
      %p257 = scmp.ne.s32.totalorder %s246, %s247
      %p258 = scmp.eq.s32.totalorder %s54, 0
      %p259 = por %p257, %p258
      %p260 = scmp.ne.s32.totalorder %s246, %s247
      %p261 = scmp.eq.s32.totalorder %s55, 3
      %p262 = por %p260, %p261
      %p264 = scmp.ne.s32.totalorder %s247, %s263
      %p265 = scmp.eq.s32.totalorder %s55, 0
      %p266 = por %p264, %p265
      %s267 = ssub.s32 %s57, %s64
      %p268 = scmp.eq.s32.totalorder %s267, 0
      %s270 = sadd.s32 %s269, 1
      %s271 = scalar_select %p268, %s269, %s270
      %p274 = pneg %p268
      %p275 = scmp.eq.s32.totalorder %s49, 3
      %p276 = por %p274, %p275
      %p277 = scmp.ne.s32.totalorder %s269, %s272
      %p278 = scmp.eq.s32.totalorder %s49, 0
      %p279 = por %p277, %p278
      %p280 = scmp.ne.s32.totalorder %s269, %s272
      %p281 = scmp.eq.s32.totalorder %s54, 3
      %p282 = por %p280, %p281
      %p283 = scmp.ne.s32.totalorder %s272, %s273
      %p284 = scmp.eq.s32.totalorder %s54, 0
      %p285 = por %p283, %p284
      %p286 = scmp.ne.s32.totalorder %s272, %s273
      %p287 = scmp.eq.s32.totalorder %s55, 3
      %p288 = por %p286, %p287
      %p290 = scmp.ne.s32.totalorder %s273, %s289
      %p291 = scmp.eq.s32.totalorder %s55, 0
      %p292 = por %p290, %p291
      %s293 = ssub.s32 %s57, %s64
      %p294 = scmp.eq.s32.totalorder %s293, 0
      %s296 = sadd.s32 %s295, 1
      %s297 = scalar_select %p294, %s295, %s296
      %p300 = pneg %p294
      %p301 = scmp.eq.s32.totalorder %s49, 3
      %p302 = por %p300, %p301
      %p303 = scmp.ne.s32.totalorder %s295, %s298
      %p304 = scmp.eq.s32.totalorder %s49, 0
      %p305 = por %p303, %p304
      %p306 = scmp.ne.s32.totalorder %s295, %s298
      %p307 = scmp.eq.s32.totalorder %s54, 3
      %p308 = por %p306, %p307
      %p309 = scmp.ne.s32.totalorder %s298, %s299
      %p310 = scmp.eq.s32.totalorder %s54, 0
      %p311 = por %p309, %p310
      %p312 = scmp.ne.s32.totalorder %s298, %s299
      %p313 = scmp.eq.s32.totalorder %s55, 3
      %p314 = por %p312, %p313
      %p316 = scmp.ne.s32.totalorder %s299, %s315
      %p317 = scmp.eq.s32.totalorder %s55, 0
      %p318 = por %p316, %p317
      %s319 = ssub.s32 %s57, %s64
      %p320 = scmp.eq.s32.totalorder %s319, 0
      %s322 = sadd.s32 %s321, 1
      %s323 = scalar_select %p320, %s321, %s322
      %p326 = pneg %p320
      %p327 = scmp.eq.s32.totalorder %s49, 3
      %p328 = por %p326, %p327
      %p329 = scmp.ne.s32.totalorder %s321, %s324
      %p330 = scmp.eq.s32.totalorder %s49, 0
      %p331 = por %p329, %p330
      %p332 = scmp.ne.s32.totalorder %s321, %s324
      %p333 = scmp.eq.s32.totalorder %s54, 3
      %p334 = por %p332, %p333
      %p335 = scmp.ne.s32.totalorder %s324, %s325
      %p336 = scmp.eq.s32.totalorder %s54, 0
      %p337 = por %p335, %p336
      %p338 = scmp.ne.s32.totalorder %s324, %s325
      %p339 = scmp.eq.s32.totalorder %s55, 3
      %p340 = por %p338, %p339
      %p342 = scmp.ne.s32.totalorder %s325, %s341
      %p343 = scmp.eq.s32.totalorder %s55, 0
      %p344 = por %p342, %p343
      %s345 = ssub.s32 %s57, %s64
      %p346 = scmp.eq.s32.totalorder %s345, 0
      %s348 = sadd.s32 %s347, 1
      %s349 = scalar_select %p346, %s347, %s348
      %p352 = pneg %p346
      %p353 = scmp.eq.s32.totalorder %s49, 3
      %p354 = por %p352, %p353
      %p355 = scmp.ne.s32.totalorder %s347, %s350
      %p356 = scmp.eq.s32.totalorder %s49, 0
      %p357 = por %p355, %p356
      %p358 = scmp.ne.s32.totalorder %s347, %s350
      %p359 = scmp.eq.s32.totalorder %s54, 3
      %p360 = por %p358, %p359
      %p361 = scmp.ne.s32.totalorder %s350, %s351
      %p362 = scmp.eq.s32.totalorder %s54, 0
      %p363 = por %p361, %p362
      %p364 = scmp.ne.s32.totalorder %s350, %s351
      %p365 = scmp.eq.s32.totalorder %s55, 3
      %p366 = por %p364, %p365
      %p368 = scmp.ne.s32.totalorder %s351, %s367
      %p369 = scmp.eq.s32.totalorder %s55, 0
      %p370 = por %p368, %p369
      %s371 = ssub.s32 %s57, %s64
      %p372 = scmp.eq.s32.totalorder %s371, 0
      %s374 = sadd.s32 %s373, 1
      %s375 = scalar_select %p372, %s373, %s374
      %p378 = pneg %p372
      %p379 = scmp.eq.s32.totalorder %s49, 3
      %p380 = por %p378, %p379
      %p381 = scmp.ne.s32.totalorder %s373, %s376
      %p382 = scmp.eq.s32.totalorder %s49, 0
      %p383 = por %p381, %p382
      %p384 = scmp.ne.s32.totalorder %s373, %s376
      %p385 = scmp.eq.s32.totalorder %s54, 3
      %p386 = por %p384, %p385
      %p387 = scmp.ne.s32.totalorder %s376, %s377
      %p388 = scmp.eq.s32.totalorder %s54, 0
      %p389 = por %p387, %p388
      %p390 = scmp.ne.s32.totalorder %s376, %s377
      %p391 = scmp.eq.s32.totalorder %s55, 3
      %p392 = por %p390, %p391
      %p394 = scmp.ne.s32.totalorder %s377, %s393
      %p395 = scmp.eq.s32.totalorder %s55, 0
      %p396 = por %p394, %p395
      %s397 = ssub.s32 %s57, %s64
      %p398 = scmp.eq.s32.totalorder %s397, 0
      %s400 = sadd.s32 %s399, 1
      %s401 = scalar_select %p398, %s399, %s400
      %p404 = pneg %p398
      %p405 = scmp.eq.s32.totalorder %s49, 3
      %p406 = por %p404, %p405
      %p407 = scmp.ne.s32.totalorder %s399, %s402
      %p408 = scmp.eq.s32.totalorder %s49, 0
      %p409 = por %p407, %p408
      %p410 = scmp.ne.s32.totalorder %s399, %s402
      %p411 = scmp.eq.s32.totalorder %s54, 3
      %p412 = por %p410, %p411
      %p413 = scmp.ne.s32.totalorder %s402, %s403
      %p414 = scmp.eq.s32.totalorder %s54, 0
      %p415 = por %p413, %p414
      %p416 = scmp.ne.s32.totalorder %s402, %s403
      %p417 = scmp.eq.s32.totalorder %s55, 3
      %p418 = por %p416, %p417
      %p420 = scmp.ne.s32.totalorder %s403, %s419
      %p421 = scmp.eq.s32.totalorder %s55, 0
      %p422 = por %p420, %p421
      %s423 = ssub.s32 %s57, %s64
      %p424 = scmp.eq.s32.totalorder %s423, 0
      %s426 = sadd.s32 %s425, 1
      %s427 = scalar_select %p424, %s425, %s426
      %p430 = pneg %p424
      %p431 = scmp.eq.s32.totalorder %s49, 3
      %p432 = por %p430, %p431
      %p433 = scmp.ne.s32.totalorder %s425, %s428
      %p434 = scmp.eq.s32.totalorder %s49, 0
      %p435 = por %p433, %p434
      %p436 = scmp.ne.s32.totalorder %s425, %s428
      %p437 = scmp.eq.s32.totalorder %s54, 3
      %p438 = por %p436, %p437
      %p439 = scmp.ne.s32.totalorder %s428, %s429
      %p440 = scmp.eq.s32.totalorder %s54, 0
      %p441 = por %p439, %p440
      %p442 = scmp.ne.s32.totalorder %s428, %s429
      %p443 = scmp.eq.s32.totalorder %s55, 3
      %p444 = por %p442, %p443
      %p446 = scmp.ne.s32.totalorder %s429, %s445
      %p447 = scmp.eq.s32.totalorder %s55, 0
      %p448 = por %p446, %p447
      %s449 = ssub.s32 %s57, %s64
      %p450 = scmp.eq.s32.totalorder %s449, 0
      %s452 = sadd.s32 %s451, 1
      %s453 = scalar_select %p450, %s451, %s452
      %p456 = pneg %p450
      %p457 = scmp.eq.s32.totalorder %s49, 3
      %p458 = por %p456, %p457
      %p459 = scmp.ne.s32.totalorder %s451, %s454
      %p460 = scmp.eq.s32.totalorder %s49, 0
      %p461 = por %p459, %p460
      %p462 = scmp.ne.s32.totalorder %s451, %s454
      %p463 = scmp.eq.s32.totalorder %s54, 3
      %p464 = por %p462, %p463
      %p465 = scmp.ne.s32.totalorder %s454, %s455
      %p466 = scmp.eq.s32.totalorder %s54, 0
      %p467 = por %p465, %p466
      %p468 = scmp.ne.s32.totalorder %s454, %s455
      %p469 = scmp.eq.s32.totalorder %s55, 3
      %p470 = por %p468, %p469
      %p472 = scmp.ne.s32.totalorder %s455, %s471
      %p473 = scmp.eq.s32.totalorder %s55, 0
      %p474 = por %p472, %p473
      %s476 = sadd.s32 %s475, 1
      %p479 = scmp.eq.s32.totalorder %s49, 3
      %p480 = scmp.ne.s32.totalorder %s475, %s477
      %p481 = scmp.eq.s32.totalorder %s49, 0
      %p482 = por %p480, %p481
      %p483 = scmp.ne.s32.totalorder %s475, %s477
      %p484 = scmp.eq.s32.totalorder %s54, 3
      %p485 = por %p483, %p484
      %p486 = scmp.ne.s32.totalorder %s477, %s478
      %p487 = scmp.eq.s32.totalorder %s54, 0
      %p488 = por %p486, %p487
      %p489 = scmp.ne.s32.totalorder %s477, %s478
      %p490 = scmp.eq.s32.totalorder %s55, 3
      %p491 = por %p489, %p490
      %p493 = scmp.ne.s32.totalorder %s478, %s492
      %p494 = scmp.eq.s32.totalorder %s55, 0
      %p495 = por %p493, %p494
      %s497 = sadd.s32 %s496, 1
      %p500 = scmp.eq.s32.totalorder %s49, 3
      %p501 = scmp.ne.s32.totalorder %s496, %s498
      %p502 = scmp.eq.s32.totalorder %s49, 0
      %p503 = por %p501, %p502
      %p504 = scmp.ne.s32.totalorder %s496, %s498
      %p505 = scmp.eq.s32.totalorder %s54, 3
      %p506 = por %p504, %p505
      %p507 = scmp.ne.s32.totalorder %s498, %s499
      %p508 = scmp.eq.s32.totalorder %s54, 0
      %p509 = por %p507, %p508
      %p510 = scmp.ne.s32.totalorder %s498, %s499
      %p511 = scmp.eq.s32.totalorder %s55, 3
      %p512 = por %p510, %p511
      %p514 = scmp.ne.s32.totalorder %s499, %s513
      %p515 = scmp.eq.s32.totalorder %s55, 0
      %p516 = por %p514, %p515
      %s518 = sadd.s32 %s517, 1
      %p521 = scmp.eq.s32.totalorder %s49, 3
      %p522 = scmp.ne.s32.totalorder %s517, %s519
      %p523 = scmp.eq.s32.totalorder %s49, 0
      %p524 = por %p522, %p523
      %p525 = scmp.ne.s32.totalorder %s517, %s519
      %p526 = scmp.eq.s32.totalorder %s54, 3
      %p527 = por %p525, %p526
      %p528 = scmp.ne.s32.totalorder %s519, %s520
      %p529 = scmp.eq.s32.totalorder %s54, 0
      %p530 = por %p528, %p529
      %p531 = scmp.ne.s32.totalorder %s519, %s520
      %p532 = scmp.eq.s32.totalorder %s55, 3
      %p533 = por %p531, %p532
      %p535 = scmp.ne.s32.totalorder %s520, %s534
      %p536 = scmp.eq.s32.totalorder %s55, 0
      %p537 = por %p535, %p536
      %s539 = sadd.s32 %s538, 1
      %p542 = scmp.eq.s32.totalorder %s49, 3
      %p543 = scmp.ne.s32.totalorder %s538, %s540
      %p544 = scmp.eq.s32.totalorder %s49, 0
      %p545 = por %p543, %p544
      %p546 = scmp.ne.s32.totalorder %s538, %s540
      %p547 = scmp.eq.s32.totalorder %s54, 3
      %p548 = por %p546, %p547
      %p549 = scmp.ne.s32.totalorder %s540, %s541
      %p550 = scmp.eq.s32.totalorder %s54, 0
      %p551 = por %p549, %p550
      %p552 = scmp.ne.s32.totalorder %s540, %s541
      %p553 = scmp.eq.s32.totalorder %s55, 3
      %p554 = por %p552, %p553
      %p556 = scmp.ne.s32.totalorder %s541, %s555
      %p557 = scmp.eq.s32.totalorder %s55, 0
      %p558 = por %p556, %p557
      %s559 = ssub.s32 %s56, %s68
      %p560 = scmp.eq.s32.totalorder %s559, 0
      %s562 = sadd.s32 %s561, 1
      %s563 = scalar_select %p560, %s561, %s562
      %p566 = pneg %p560
      %p567 = scmp.eq.s32.totalorder %s49, 3
      %p568 = por %p566, %p567
      %p569 = scmp.ne.s32.totalorder %s561, %s564
      %p570 = scmp.eq.s32.totalorder %s49, 0
      %p571 = por %p569, %p570
      %p572 = scmp.ne.s32.totalorder %s561, %s564
      %p573 = scmp.eq.s32.totalorder %s54, 3
      %p574 = por %p572, %p573
      %p575 = scmp.ne.s32.totalorder %s564, %s565
      %p576 = scmp.eq.s32.totalorder %s54, 0
      %p577 = por %p575, %p576
      %p578 = scmp.ne.s32.totalorder %s564, %s565
      %p579 = scmp.eq.s32.totalorder %s55, 3
      %p580 = por %p578, %p579
      %p582 = scmp.ne.s32.totalorder %s565, %s581
      %p583 = scmp.eq.s32.totalorder %s55, 0
      %p584 = por %p582, %p583
      %p585 = scmp.le.s32.totalorder 1, %s49
      %p586 = scmp.lt.s32.totalorder %s49, 5
      %p587 = pnand %p585, %p586
      %p588 = pneg %p587
      // Predicated region
      $region9: #{tpu_custom_call.1} parent=5 // pred_check
        _
      $region10: #{tpu_custom_call.1} parent=5 // pred_check_branch
        %590 = sbr.rel (%p587) target = $region12
      $region11: #{tpu_custom_call.1} parent=5 // pred_region
        %s591 = ssub.s32 %s49, 1
        // Predicated region
        $region13: #{tpu_custom_call.1} parent=11 // pred_check
          %p592 = pneg %p134
        $region14: #{tpu_custom_call.1} parent=11 // pred_check_branch
          %594 = sbr.rel (%p592) target = $region16
        $region15: #{tpu_custom_call.1} parent=11 // pred_region
          _
        $region16: #{tpu_custom_call.1} parent=11 // pred_fallthru
          _
        // Predicated region
        $region17: #{tpu_custom_call.1} parent=11 // pred_check
          %p595 = pneg %p155
        $region18: #{tpu_custom_call.1} parent=11 // pred_check_branch
          %597 = sbr.rel (%p595) target = $region20
        $region19: #{tpu_custom_call.1} parent=11 // pred_region
          %599 = vsyncadd [#allocation8], 0
          %s601 = sshll.u32 %s3, 4
          %s602 = int_to_ptr.hbm [resolvable:$true] %s601
          %s603 = sshll.u32 [#allocation9], 4
          %s604 = int_to_ptr.vmem [resolvable:$true] %s603
          %606 = dma.hbm_to_vmem [thread:$0]  %s602, 16, %s604, [#allocation8]
        $region20: #{tpu_custom_call.1} parent=11 // pred_fallthru
          _
        // Predicated region
        $region21: #{tpu_custom_call.1} parent=11 // pred_check
          %p607 = pneg %p488
        $region22: #{tpu_custom_call.1} parent=11 // pred_check_branch
          %609 = sbr.rel (%p607) target = $region24
        $region23: #{tpu_custom_call.1} parent=11 // pred_region
          %611 = vsyncadd [#allocation23], 0
          %s612 = sshll.u32 %s16, 4
          %s613 = int_to_ptr.hbm [resolvable:$true] %s612
          %s614 = sshll.u32 [#allocation22], 4
          %s615 = int_to_ptr.vmem [resolvable:$true] %s614
          %620 = dma.hbm_to_vmem [thread:$0]  %s613, 256, %s615, [#allocation23], 64, 64, 4
        $region24: #{tpu_custom_call.1} parent=11 // pred_fallthru
          _
        // Predicated region
        $region25: #{tpu_custom_call.1} parent=11 // pred_check
          %p621 = pneg %p509
        $region26: #{tpu_custom_call.1} parent=11 // pred_check_branch
          %623 = sbr.rel (%p621) target = $region28
        $region27: #{tpu_custom_call.1} parent=11 // pred_region
          %625 = vsyncadd [#allocation23], 0
          %s627 = sshll.u32 %s17, 4
          %s628 = int_to_ptr.hbm [resolvable:$true] %s627
          %s629 = sshll.u32 [#allocation24], 4
          %s630 = int_to_ptr.vmem [resolvable:$true] %s629
          %632 = dma.hbm_to_vmem [thread:$0]  %s628, 16, %s630, [#allocation23]
        $region28: #{tpu_custom_call.1} parent=11 // pred_fallthru
          _
        // Predicated region
        $region29: #{tpu_custom_call.1} parent=11 // pred_check
          %p633 = pneg %p530
        $region30: #{tpu_custom_call.1} parent=11 // pred_check_branch
          %635 = sbr.rel (%p633) target = $region32
        $region31: #{tpu_custom_call.1} parent=11 // pred_region
          _
        $region32: #{tpu_custom_call.1} parent=11 // pred_fallthru
          _
        // Predicated region
        $region33: #{tpu_custom_call.1} parent=11 // pred_check
          %p636 = pneg %p551
        $region34: #{tpu_custom_call.1} parent=11 // pred_check_branch
          %638 = sbr.rel (%p636) target = $region36
        $region35: #{tpu_custom_call.1} parent=11 // pred_region
          %640 = vsyncadd [#allocation26], 0
          %s642 = sshll.u32 %s19, 4
          %s643 = int_to_ptr.hbm [resolvable:$true] %s642
          %s644 = sshll.u32 [#allocation25], 4
          %s645 = int_to_ptr.vmem [resolvable:$true] %s644
          %647 = dma.hbm_to_vmem [thread:$0]  %s643, 16, %s645, [#allocation26]
        $region36: #{tpu_custom_call.1} parent=11 // pred_fallthru
          _
      $region12: #{tpu_custom_call.1} parent=5 // pred_fallthru
        _
      %p648 = scmp.lt.s32.totalorder %s49, 4
      // Predicated region
      $region37: #{tpu_custom_call.1} parent=5 // pred_check
        %p649 = pneg %p648
      $region38: #{tpu_custom_call.1} parent=5 // pred_check_branch
        %651 = sbr.rel (%p649) target = $region40
      $region39: #{tpu_custom_call.1} parent=5 // pred_region
        // Predicated region
        $region41: #{tpu_custom_call.1} parent=39 // pred_check
          %p652 = pneg %p81
        $region42: #{tpu_custom_call.1} parent=39 // pred_check_branch
          %654 = sbr.rel (%p652) target = $region44
        $region43: #{tpu_custom_call.1} parent=39 // pred_region
          %s655 = sand.u32 %s71, 1
          %s656 = scalar_lea.sflag [#allocation5], %s655
          %s657 = sand.u32 %s71, 1
          %s658 = smul.addr %s657, 8
          %s659 = scalar_lea.vmem [#allocation4], %s658
          %661 = vsyncadd %s656, 0
          %s662 = smul.addr %s56, 8
          %s663 = scalar_lea.hbm %s0, %s662
          %s665 = sshll.u32 %s663, 4
          %s666 = int_to_ptr.hbm [resolvable:$true] %s665
          %s667 = sshll.u32 %s659, 4
          %s668 = int_to_ptr.vmem [resolvable:$true] %s667
          %670 = dma.hbm_to_vmem [thread:$0]  %s666, 128, %s668, %s656
        $region44: #{tpu_custom_call.1} parent=39 // pred_fallthru
          _
        // Predicated region
        $region45: #{tpu_custom_call.1} parent=39 // pred_check
          %p671 = pneg %p107
        $region46: #{tpu_custom_call.1} parent=39 // pred_check_branch
          %673 = sbr.rel (%p671) target = $region48
        $region47: #{tpu_custom_call.1} parent=39 // pred_region
          %s674 = sand.u32 %s49, 1
          %s675 = scalar_lea.sflag [#allocation8], %s674
          %s676 = sand.u32 %s97, 1
          %s677 = scalar_lea.vmem [#allocation7], %s676
          %679 = vsyncadd %s675, 0
          %s680 = scalar_lea.hbm %s1, %s56
          %s682 = sshll.u32 %s680, 4
          %s683 = int_to_ptr.hbm [resolvable:$true] %s682
          %s684 = sshll.u32 %s677, 4
          %s685 = int_to_ptr.vmem [resolvable:$true] %s684
          %687 = dma.hbm_to_vmem [thread:$0]  %s683, 16, %s685, %s675
        $region48: #{tpu_custom_call.1} parent=39 // pred_fallthru
          _
        // Predicated region
        $region49: #{tpu_custom_call.1} parent=39 // pred_check
          %p688 = pneg %p175
        $region50: #{tpu_custom_call.1} parent=39 // pred_check_branch
          %690 = sbr.rel (%p688) target = $region52
        $region51: #{tpu_custom_call.1} parent=39 // pred_region
          %p691 = scmp.lt.s32.totalorder %s57, 1
          %s692 = scalar_select %p691, %s57, 1
          %s693 = smul.addr %s692, 4
          %s694 = smul.addr %s693, 4
          %s695 = scalar_lea.vmem %s4, %s694
        $region52: #{tpu_custom_call.1} parent=39 // pred_fallthru
          _
        // Predicated region
        $region53: #{tpu_custom_call.1} parent=39 // pred_check
          %p696 = pneg %p201
        $region54: #{tpu_custom_call.1} parent=39 // pred_check_branch
          %698 = sbr.rel (%p696) target = $region56
        $region55: #{tpu_custom_call.1} parent=39 // pred_region
          %s699 = sand.u32 %s49, 1
          %s700 = scalar_lea.sflag [#allocation11], %s699
          %s701 = sand.u32 %s191, 1
          %s702 = scalar_lea.vmem [#allocation10], %s701
          %704 = vsyncadd %s700, 0
          %s705 = scalar_lea.hbm %s5, %s57
          %s707 = sshll.u32 %s705, 4
          %s708 = int_to_ptr.hbm [resolvable:$true] %s707
          %s709 = sshll.u32 %s702, 4
          %s710 = int_to_ptr.vmem [resolvable:$true] %s709
          %712 = dma.hbm_to_vmem [thread:$0]  %s708, 16, %s710, %s700
        $region56: #{tpu_custom_call.1} parent=39 // pred_fallthru
          _
        // Predicated region
        $region57: #{tpu_custom_call.1} parent=39 // pred_check
          %p713 = pneg %p227
        $region58: #{tpu_custom_call.1} parent=39 // pred_check_branch
          %715 = sbr.rel (%p713) target = $region60
        $region59: #{tpu_custom_call.1} parent=39 // pred_region
          %p716 = scmp.lt.s32.totalorder %s57, 1
          %s717 = scalar_select %p716, %s57, 1
          %s718 = smul.addr %s717, 4
          %s719 = smul.addr %s718, 4
          %s720 = scalar_lea.vmem %s6, %s719
        $region60: #{tpu_custom_call.1} parent=39 // pred_fallthru
          _
        // Predicated region
        $region61: #{tpu_custom_call.1} parent=39 // pred_check
          %p721 = pneg %p253
        $region62: #{tpu_custom_call.1} parent=39 // pred_check_branch
          %723 = sbr.rel (%p721) target = $region64
        $region63: #{tpu_custom_call.1} parent=39 // pred_region
          %s724 = sand.u32 %s49, 1
          %s725 = scalar_lea.sflag [#allocation11], %s724
          %s726 = sand.u32 %s243, 1
          %s727 = scalar_lea.vmem [#allocation12], %s726
          %729 = vsyncadd %s725, 0
          %s730 = scalar_lea.hbm %s7, %s57
          %s732 = sshll.u32 %s730, 4
          %s733 = int_to_ptr.hbm [resolvable:$true] %s732
          %s734 = sshll.u32 %s727, 4
          %s735 = int_to_ptr.vmem [resolvable:$true] %s734
          %737 = dma.hbm_to_vmem [thread:$0]  %s733, 16, %s735, %s725
        $region64: #{tpu_custom_call.1} parent=39 // pred_fallthru
          _
        // Predicated region
        $region65: #{tpu_custom_call.1} parent=39 // pred_check
          %p738 = pneg %p279
        $region66: #{tpu_custom_call.1} parent=39 // pred_check_branch
          %740 = sbr.rel (%p738) target = $region68
        $region67: #{tpu_custom_call.1} parent=39 // pred_region
          %s741 = sand.u32 %s49, 1
          %s742 = scalar_lea.sflag [#allocation14], %s741
          %s743 = sand.u32 %s269, 1
          %s744 = scalar_lea.vmem [#allocation13], %s743
          %746 = vsyncadd %s742, 0
          %s747 = scalar_lea.hbm %s8, %s57
          %s749 = sshll.u32 %s747, 4
          %s750 = int_to_ptr.hbm [resolvable:$true] %s749
          %s751 = sshll.u32 %s744, 4
          %s752 = int_to_ptr.vmem [resolvable:$true] %s751
          %754 = dma.hbm_to_vmem [thread:$0]  %s750, 16, %s752, %s742
        $region68: #{tpu_custom_call.1} parent=39 // pred_fallthru
          _
        // Predicated region
        $region69: #{tpu_custom_call.1} parent=39 // pred_check
          %p755 = pneg %p305
        $region70: #{tpu_custom_call.1} parent=39 // pred_check_branch
          %757 = sbr.rel (%p755) target = $region72
        $region71: #{tpu_custom_call.1} parent=39 // pred_region
          %s758 = sand.u32 %s49, 1
          %s759 = scalar_lea.sflag [#allocation14], %s758
          %s760 = sand.u32 %s295, 1
          %s761 = scalar_lea.vmem [#allocation15], %s760
          %763 = vsyncadd %s759, 0
          %s764 = scalar_lea.hbm %s9, %s57
          %s766 = sshll.u32 %s764, 4
          %s767 = int_to_ptr.hbm [resolvable:$true] %s766
          %s768 = sshll.u32 %s761, 4
          %s769 = int_to_ptr.vmem [resolvable:$true] %s768
          %771 = dma.hbm_to_vmem [thread:$0]  %s767, 16, %s769, %s759
        $region72: #{tpu_custom_call.1} parent=39 // pred_fallthru
          _
        // Predicated region
        $region73: #{tpu_custom_call.1} parent=39 // pred_check
          %p772 = pneg %p331
        $region74: #{tpu_custom_call.1} parent=39 // pred_check_branch
          %774 = sbr.rel (%p772) target = $region76
        $region75: #{tpu_custom_call.1} parent=39 // pred_region
          %p775 = scmp.lt.s32.totalorder %s57, 1
          %s776 = scalar_select %p775, %s57, 1
          %s777 = smul.addr %s776, 4
          %s778 = smul.addr %s777, 4
          %s779 = scalar_lea.vmem %s10, %s778
        $region76: #{tpu_custom_call.1} parent=39 // pred_fallthru
          _
        // Predicated region
        $region77: #{tpu_custom_call.1} parent=39 // pred_check
          %p780 = pneg %p357
        $region78: #{tpu_custom_call.1} parent=39 // pred_check_branch
          %782 = sbr.rel (%p780) target = $region80
        $region79: #{tpu_custom_call.1} parent=39 // pred_region
          %s783 = sand.u32 %s49, 1
          %s784 = scalar_lea.sflag [#allocation17], %s783
          %s785 = sand.u32 %s347, 1
          %s786 = scalar_lea.vmem [#allocation16], %s785
          %788 = vsyncadd %s784, 0
          %s789 = scalar_lea.hbm %s11, %s57
          %s791 = sshll.u32 %s789, 4
          %s792 = int_to_ptr.hbm [resolvable:$true] %s791
          %s793 = sshll.u32 %s786, 4
          %s794 = int_to_ptr.vmem [resolvable:$true] %s793
          %796 = dma.hbm_to_vmem [thread:$0]  %s792, 16, %s794, %s784
        $region80: #{tpu_custom_call.1} parent=39 // pred_fallthru
          _
        // Predicated region
        $region81: #{tpu_custom_call.1} parent=39 // pred_check
          %p797 = pneg %p383
        $region82: #{tpu_custom_call.1} parent=39 // pred_check_branch
          %799 = sbr.rel (%p797) target = $region84
        $region83: #{tpu_custom_call.1} parent=39 // pred_region
          %p800 = scmp.lt.s32.totalorder %s57, 1
          %s801 = scalar_select %p800, %s57, 1
          %s802 = smul.addr %s801, 8
          %s803 = smul.addr %s802, 4
          %s804 = scalar_lea.vmem %s12, %s803
        $region84: #{tpu_custom_call.1} parent=39 // pred_fallthru
          _
        // Predicated region
        $region85: #{tpu_custom_call.1} parent=39 // pred_check
          %p805 = pneg %p409
        $region86: #{tpu_custom_call.1} parent=39 // pred_check_branch
          %807 = sbr.rel (%p805) target = $region88
        $region87: #{tpu_custom_call.1} parent=39 // pred_region
          %s808 = sand.u32 %s49, 1
          %s809 = scalar_lea.sflag [#allocation17], %s808
          %s810 = sand.u32 %s399, 1
          %s811 = scalar_lea.vmem [#allocation18], %s810
          %813 = vsyncadd %s809, 0
          %s814 = scalar_lea.hbm %s13, %s57
          %s816 = sshll.u32 %s814, 4
          %s817 = int_to_ptr.hbm [resolvable:$true] %s816
          %s818 = sshll.u32 %s811, 4
          %s819 = int_to_ptr.vmem [resolvable:$true] %s818
          %821 = dma.hbm_to_vmem [thread:$0]  %s817, 16, %s819, %s809
        $region88: #{tpu_custom_call.1} parent=39 // pred_fallthru
          _
        // Predicated region
        $region89: #{tpu_custom_call.1} parent=39 // pred_check
          %p822 = pneg %p435
        $region90: #{tpu_custom_call.1} parent=39 // pred_check_branch
          %824 = sbr.rel (%p822) target = $region92
        $region91: #{tpu_custom_call.1} parent=39 // pred_region
          %s825 = sand.u32 %s49, 1
          %s826 = scalar_lea.sflag [#allocation20], %s825
          %s827 = sand.u32 %s425, 1
          %s828 = scalar_lea.vmem [#allocation19], %s827
          %830 = vsyncadd %s826, 0
          %s831 = scalar_lea.hbm %s14, %s57
          %s833 = sshll.u32 %s831, 4
          %s834 = int_to_ptr.hbm [resolvable:$true] %s833
          %s835 = sshll.u32 %s828, 4
          %s836 = int_to_ptr.vmem [resolvable:$true] %s835
          %838 = dma.hbm_to_vmem [thread:$0]  %s834, 16, %s836, %s826
        $region92: #{tpu_custom_call.1} parent=39 // pred_fallthru
          _
        // Predicated region
        $region93: #{tpu_custom_call.1} parent=39 // pred_check
          %p839 = pneg %p461
        $region94: #{tpu_custom_call.1} parent=39 // pred_check_branch
          %841 = sbr.rel (%p839) target = $region96
        $region95: #{tpu_custom_call.1} parent=39 // pred_region
          %s842 = sand.u32 %s49, 1
          %s843 = scalar_lea.sflag [#allocation20], %s842
          %s844 = sand.u32 %s451, 1
          %s845 = scalar_lea.vmem [#allocation21], %s844
          %847 = vsyncadd %s843, 0
          %s848 = scalar_lea.hbm %s15, %s57
          %s850 = sshll.u32 %s848, 4
          %s851 = int_to_ptr.hbm [resolvable:$true] %s850
          %s852 = sshll.u32 %s845, 4
          %s853 = int_to_ptr.vmem [resolvable:$true] %s852
          %855 = dma.hbm_to_vmem [thread:$0]  %s851, 16, %s853, %s843
        $region96: #{tpu_custom_call.1} parent=39 // pred_fallthru
          _
      $region40: #{tpu_custom_call.1} parent=5 // pred_fallthru
        _
      %p856 = scmp.le.s32.totalorder 1, %s49
      %p857 = scmp.lt.s32.totalorder %s49, 5
      %p858 = pnand %p856, %p857
      %p859 = pneg %p858
      // Predicated region
      $region97: #{tpu_custom_call.1} parent=5 // pred_check
        _
      $region98: #{tpu_custom_call.1} parent=5 // pred_check_branch
        %861 = sbr.rel (%p858) target = $region100
      $region99: #{tpu_custom_call.1} parent=5 // pred_region
        %s862 = ssub.s32 %s49, 1
        %s863 = sand.u32 %s74, 1
        %s864 = scalar_lea.sflag [#allocation5], %s863
        %s865 = sand.u32 %s74, 1
        %s866 = smul.addr %s865, 8
        %s867 = scalar_lea.vmem [#allocation4], %s866
        // Predicated region
        $region101: #{tpu_custom_call.1} parent=99 // pred_check
          %p868 = pneg %p87
        $region102: #{tpu_custom_call.1} parent=99 // pred_check_branch
          %870 = sbr.rel (%p868) target = $region104
        $region103: #{tpu_custom_call.1} parent=99 // pred_region
          %872 = dma.done %s864, 128
        $region104: #{tpu_custom_call.1} parent=99 // pred_fallthru
          _
        %s873 = sand.u32 %s54, 1
        %s874 = scalar_lea.sflag [#allocation8], %s873
        %s875 = sand.u32 %s100, 1
        %s876 = scalar_lea.vmem [#allocation7], %s875
        // Predicated region
        $region105: #{tpu_custom_call.1} parent=99 // pred_check
          %p877 = pneg %p113
        $region106: #{tpu_custom_call.1} parent=99 // pred_check_branch
          %879 = sbr.rel (%p877) target = $region108
        $region107: #{tpu_custom_call.1} parent=99 // pred_region
          %881 = dma.done %s874, 16
        $region108: #{tpu_custom_call.1} parent=99 // pred_fallthru
          _
        // Predicated region
        $region109: #{tpu_custom_call.1} parent=99 // pred_check
          %p882 = pneg %p155
        $region110: #{tpu_custom_call.1} parent=99 // pred_check_branch
          %884 = sbr.rel (%p882) target = $region112
        $region111: #{tpu_custom_call.1} parent=99 // pred_region
          %886 = dma.done [#allocation8], 16
        $region112: #{tpu_custom_call.1} parent=99 // pred_fallthru
          _
        %s887 = sand.u32 %s54, 1
        %s888 = scalar_lea.sflag [#allocation11], %s887
        %s889 = sand.u32 %s194, 1
        %s890 = scalar_lea.vmem [#allocation10], %s889
        // Predicated region
        $region113: #{tpu_custom_call.1} parent=99 // pred_check
          %p891 = pneg %p207
        $region114: #{tpu_custom_call.1} parent=99 // pred_check_branch
          %893 = sbr.rel (%p891) target = $region116
        $region115: #{tpu_custom_call.1} parent=99 // pred_region
          %895 = dma.done %s888, 16
        $region116: #{tpu_custom_call.1} parent=99 // pred_fallthru
          _
        %s896 = sand.u32 %s54, 1
        %s897 = scalar_lea.sflag [#allocation11], %s896
        %s898 = sand.u32 %s246, 1
        %s899 = scalar_lea.vmem [#allocation12], %s898
        // Predicated region
        $region117: #{tpu_custom_call.1} parent=99 // pred_check
          %p900 = pneg %p259
        $region118: #{tpu_custom_call.1} parent=99 // pred_check_branch
          %902 = sbr.rel (%p900) target = $region120
        $region119: #{tpu_custom_call.1} parent=99 // pred_region
          %904 = dma.done %s897, 16
        $region120: #{tpu_custom_call.1} parent=99 // pred_fallthru
          _
        %s905 = sand.u32 %s54, 1
        %s906 = scalar_lea.sflag [#allocation14], %s905
        %s907 = sand.u32 %s272, 1
        %s908 = scalar_lea.vmem [#allocation13], %s907
        // Predicated region
        $region121: #{tpu_custom_call.1} parent=99 // pred_check
          %p909 = pneg %p285
        $region122: #{tpu_custom_call.1} parent=99 // pred_check_branch
          %911 = sbr.rel (%p909) target = $region124
        $region123: #{tpu_custom_call.1} parent=99 // pred_region
          %913 = dma.done %s906, 16
        $region124: #{tpu_custom_call.1} parent=99 // pred_fallthru
          _
        %s914 = sand.u32 %s54, 1
        %s915 = scalar_lea.sflag [#allocation14], %s914
        %s916 = sand.u32 %s298, 1
        %s917 = scalar_lea.vmem [#allocation15], %s916
        // Predicated region
        $region125: #{tpu_custom_call.1} parent=99 // pred_check
          %p918 = pneg %p311
        $region126: #{tpu_custom_call.1} parent=99 // pred_check_branch
          %920 = sbr.rel (%p918) target = $region128
        $region127: #{tpu_custom_call.1} parent=99 // pred_region
          %922 = dma.done %s915, 16
        $region128: #{tpu_custom_call.1} parent=99 // pred_fallthru
          _
        %s923 = sand.u32 %s54, 1
        %s924 = scalar_lea.sflag [#allocation17], %s923
        %s925 = sand.u32 %s350, 1
        %s926 = scalar_lea.vmem [#allocation16], %s925
        // Predicated region
        $region129: #{tpu_custom_call.1} parent=99 // pred_check
          %p927 = pneg %p363
        $region130: #{tpu_custom_call.1} parent=99 // pred_check_branch
          %929 = sbr.rel (%p927) target = $region132
        $region131: #{tpu_custom_call.1} parent=99 // pred_region
          %931 = dma.done %s924, 16
        $region132: #{tpu_custom_call.1} parent=99 // pred_fallthru
          _
        %s932 = sand.u32 %s54, 1
        %s933 = scalar_lea.sflag [#allocation17], %s932
        %s934 = sand.u32 %s402, 1
        %s935 = scalar_lea.vmem [#allocation18], %s934
        // Predicated region
        $region133: #{tpu_custom_call.1} parent=99 // pred_check
          %p936 = pneg %p415
        $region134: #{tpu_custom_call.1} parent=99 // pred_check_branch
          %938 = sbr.rel (%p936) target = $region136
        $region135: #{tpu_custom_call.1} parent=99 // pred_region
          %940 = dma.done %s933, 16
        $region136: #{tpu_custom_call.1} parent=99 // pred_fallthru
          _
        %s941 = sand.u32 %s54, 1
        %s942 = scalar_lea.sflag [#allocation20], %s941
        %s943 = sand.u32 %s428, 1
        %s944 = scalar_lea.vmem [#allocation19], %s943
        // Predicated region
        $region137: #{tpu_custom_call.1} parent=99 // pred_check
          %p945 = pneg %p441
        $region138: #{tpu_custom_call.1} parent=99 // pred_check_branch
          %947 = sbr.rel (%p945) target = $region140
        $region139: #{tpu_custom_call.1} parent=99 // pred_region
          %949 = dma.done %s942, 16
        $region140: #{tpu_custom_call.1} parent=99 // pred_fallthru
          _
        %s950 = sand.u32 %s54, 1
        %s951 = scalar_lea.sflag [#allocation20], %s950
        %s952 = sand.u32 %s454, 1
        %s953 = scalar_lea.vmem [#allocation21], %s952
        // Predicated region
        $region141: #{tpu_custom_call.1} parent=99 // pred_check
          %p954 = pneg %p467
        $region142: #{tpu_custom_call.1} parent=99 // pred_check_branch
          %956 = sbr.rel (%p954) target = $region144
        $region143: #{tpu_custom_call.1} parent=99 // pred_region
          %958 = dma.done %s951, 16
        $region144: #{tpu_custom_call.1} parent=99 // pred_fallthru
          _
        // Predicated region
        $region145: #{tpu_custom_call.1} parent=99 // pred_check
          %p959 = pneg %p488
        $region146: #{tpu_custom_call.1} parent=99 // pred_check_branch
          %961 = sbr.rel (%p959) target = $region148
        $region147: #{tpu_custom_call.1} parent=99 // pred_region
          %963 = dma.done [#allocation23], 256
        $region148: #{tpu_custom_call.1} parent=99 // pred_fallthru
          _
        // Predicated region
        $region149: #{tpu_custom_call.1} parent=99 // pred_check
          %p964 = pneg %p509
        $region150: #{tpu_custom_call.1} parent=99 // pred_check_branch
          %966 = sbr.rel (%p964) target = $region152
        $region151: #{tpu_custom_call.1} parent=99 // pred_region
          %968 = dma.done [#allocation23], 16
        $region152: #{tpu_custom_call.1} parent=99 // pred_fallthru
          _
        // Predicated region
        $region153: #{tpu_custom_call.1} parent=99 // pred_check
          %p969 = pneg %p551
        $region154: #{tpu_custom_call.1} parent=99 // pred_check_branch
          %971 = sbr.rel (%p969) target = $region156
        $region155: #{tpu_custom_call.1} parent=99 // pred_region
          %973 = dma.done [#allocation26], 16
        $region156: #{tpu_custom_call.1} parent=99 // pred_fallthru
          _
        %s974 = sand.u32 %s74, 1
        %s975 = scalar_lea.sflag [#allocation5], %s974
        %s976 = sand.u32 %s74, 1
        %s977 = smul.addr %s976, 8
        %s978 = scalar_lea.vmem [#allocation4], %s977
        %p979 = pneg %p87
        %p980 = pneg %p84
        %s981 = sand.u32 %s54, 1
        %s982 = scalar_lea.sflag [#allocation8], %s981
        %s983 = sand.u32 %s100, 1
        %s984 = scalar_lea.vmem [#allocation7], %s983
        %p985 = pneg %p113
        %p986 = pneg %p110
        %p987 = pneg %p134
        %p988 = pneg %p131
        %p989 = pneg %p155
        %p990 = pneg %p152
        %p991 = scmp.lt.s32.totalorder %s59, 1
        %s992 = scalar_select %p991, %s59, 1
        %s993 = smul.addr %s992, 4
        %s994 = smul.addr %s993, 4
        %s995 = scalar_lea.vmem %s4, %s994
        %p996 = pneg %p181
        %p997 = pneg %p178
        %s998 = sand.u32 %s54, 1
        %s999 = scalar_lea.sflag [#allocation11], %s998
        %s1000 = sand.u32 %s194, 1
        %s1001 = scalar_lea.vmem [#allocation10], %s1000
        %p1002 = pneg %p207
        %p1003 = pneg %p204
        %p1004 = scmp.lt.s32.totalorder %s59, 1
        %s1005 = scalar_select %p1004, %s59, 1
        %s1006 = smul.addr %s1005, 4
        %s1007 = smul.addr %s1006, 4
        %s1008 = scalar_lea.vmem %s6, %s1007
        %p1009 = pneg %p233
        %p1010 = pneg %p230
        %s1011 = sand.u32 %s54, 1
        %s1012 = scalar_lea.sflag [#allocation11], %s1011
        %s1013 = sand.u32 %s246, 1
        %s1014 = scalar_lea.vmem [#allocation12], %s1013
        %p1015 = pneg %p259
        %p1016 = pneg %p256
        %s1017 = sand.u32 %s54, 1
        %s1018 = scalar_lea.sflag [#allocation14], %s1017
        %s1019 = sand.u32 %s272, 1
        %s1020 = scalar_lea.vmem [#allocation13], %s1019
        %p1021 = pneg %p285
        %p1022 = pneg %p282
        %s1023 = sand.u32 %s54, 1
        %s1024 = scalar_lea.sflag [#allocation14], %s1023
        %s1025 = sand.u32 %s298, 1
        %s1026 = scalar_lea.vmem [#allocation15], %s1025
        %p1027 = pneg %p311
        %p1028 = pneg %p308
        %p1029 = scmp.lt.s32.totalorder %s59, 1
        %s1030 = scalar_select %p1029, %s59, 1
        %s1031 = smul.addr %s1030, 4
        %s1032 = smul.addr %s1031, 4
        %s1033 = scalar_lea.vmem %s10, %s1032
        %p1034 = pneg %p337
        %p1035 = pneg %p334
        %s1036 = sand.u32 %s54, 1
        %s1037 = scalar_lea.sflag [#allocation17], %s1036
        %s1038 = sand.u32 %s350, 1
        %s1039 = scalar_lea.vmem [#allocation16], %s1038
        %p1040 = pneg %p363
        %p1041 = pneg %p360
        %p1042 = scmp.lt.s32.totalorder %s59, 1
        %s1043 = scalar_select %p1042, %s59, 1
        %s1044 = smul.addr %s1043, 8
        %s1045 = smul.addr %s1044, 4
        %s1046 = scalar_lea.vmem %s12, %s1045
        %p1047 = pneg %p389
        %p1048 = pneg %p386
        %s1049 = sand.u32 %s54, 1
        %s1050 = scalar_lea.sflag [#allocation17], %s1049
        %s1051 = sand.u32 %s402, 1
        %s1052 = scalar_lea.vmem [#allocation18], %s1051
        %p1053 = pneg %p415
        %p1054 = pneg %p412
        %s1055 = sand.u32 %s54, 1
        %s1056 = scalar_lea.sflag [#allocation20], %s1055
        %s1057 = sand.u32 %s428, 1
        %s1058 = scalar_lea.vmem [#allocation19], %s1057
        %p1059 = pneg %p441
        %p1060 = pneg %p438
        %s1061 = sand.u32 %s54, 1
        %s1062 = scalar_lea.sflag [#allocation20], %s1061
        %s1063 = sand.u32 %s454, 1
        %s1064 = scalar_lea.vmem [#allocation21], %s1063
        %p1065 = pneg %p467
        %p1066 = pneg %p464
        %p1067 = pneg %p488
        %p1068 = pneg %p485
        %p1069 = pneg %p509
        %p1070 = pneg %p506
        %p1071 = pneg %p530
        %p1072 = pneg %p527
        %p1073 = pneg %p551
        %p1074 = pneg %p548
        %p1075 = pneg %p577
        %p1076 = pneg %p574
        %s1077 = sand.u32 %s564, 1
        %s1078 = scalar_lea.sflag [#allocation6], %s1077
        %s1079 = sand.u32 %s564, 1
        %s1080 = scalar_lea.vmem [#allocation27], %s1079
        %p1081 = scmp.lt.s32.totalorder %s59, 1
        %s1082 = scalar_select %p1081, %s59, 1
        %s1083 = smul.addr %s1082, 4
        %s1084 = smul.addr %s1083, 4
        %s1085 = scalar_lea.vmem %s4, %s1084
        %p1086 = scmp.lt.s32.totalorder %s59, 1
        %s1087 = scalar_select %p1086, %s59, 1
        %s1088 = smul.addr %s1087, 4
        %s1089 = smul.addr %s1088, 4
        %s1090 = scalar_lea.vmem %s6, %s1089
        %p1091 = scmp.lt.s32.totalorder %s59, 1
        %s1092 = scalar_select %p1091, %s59, 1
        %s1093 = smul.addr %s1092, 4
        %s1094 = smul.addr %s1093, 4
        %s1095 = scalar_lea.vmem %s10, %s1094
        %p1096 = scmp.lt.s32.totalorder %s59, 1
        %s1097 = scalar_select %p1096, %s59, 1
        %s1098 = smul.addr %s1097, 8
        %s1099 = smul.addr %s1098, 4
        %s1100 = scalar_lea.vmem %s12, %s1099
        %p1102 = scmp.eq.s32.totalorder %s59, 0
        // Predicated region
        $region157: #{tpu_custom_call.1} parent=99 // pred_check
          %p1103 = pneg %p1102
        $region158: #{tpu_custom_call.1} parent=99 // pred_check_branch
          %1105 = sbr.rel (%p1103) target = $region160
        $region159: #{tpu_custom_call.1} parent=99 // pred_region
          %v1106 = vld [vmem:[%s867] sm:$0xff]
          %v1107 = vld [vmem:[%s2] sm:$0x1]
          %v1108 = vld [vmem:[#allocation9] sm:$0x1]
          %vm1109 = vcmask 261120
          %v1110 = vsel %vm1109, %v1106, 0.0
          %1111 = vadd.xlane.f32.xlu0 %v1110
          %v1112 = vpop.xlane.xlu0 %1111
          %v1113 = vrcp.pop 32.0
          %v1114 = vmul.f32 32.0, %v1113
          %v1115 = vsub.f32 1.0, %v1114
          %v1116 = vmul.f32 %v1113, %v1115
          %v1117 = vadd.f32 %v1113, %v1116
          %vm1118 = vweird.f32 %v1113
          %v1119 = vsel %vm1118, %v1113, %v1117
          %v1120 = vmul.f32 %v1112, %v1119
          %v1121 = vsub.f32 %v1106, %v1120
          %v1122 = vmul.f32 %v1121, %v1121
          %v1123 = vsel %vm1109, %v1122, 0.0
          %1124 = vadd.xlane.f32.xlu0 %v1123
          %v1125 = vpop.xlane.xlu0 %1124
          %v1126 = vmul.f32 %v1125, %v1119
          %v1127 = vadd.f32 %v1126, 1e-12
          %v1128 = vrsqrt.pop %v1127
          %v1129 = vmul.f32 %v1128, %v1127
          %v1130 = vmul.f32 %v1129, %v1128
          %v1131 = vmul.f32 0.5, %v1130
          %v1132 = vsub.f32 1.5, %v1131
          %v1133 = vmul.f32 %v1128, %v1132
          %vm1134 = vweird.f32 %v1127
          %vm1135 = vweird.f32 %v1128
          %vm1136 = vmor %vm1134, %vm1135
          %v1137 = vsel %vm1136, %v1128, %v1133
          %v1138 = vmul.f32 %v1121, %v1137
          %v1140 = vperm.slane %v1107, 0
          %v1142 = vmul.f32 %v1138, %v1140
          %v1144 = vperm.slane %v1108, 0
          %v1146 = vadd.f32 %v1142, %v1144
          %1147 = vst.msk [vmem:[#allocation2] sm:$0xff] %vm1109, %v1146
        $region160: #{tpu_custom_call.1} parent=99 // pred_fallthru
          _
        %v1148 = vld [vmem:[#allocation2] sm:$0xff]
        %v1149 = vpack.c.bf16 %v1148, %v1148
        %v1150 = vld [vmem:[%s1085] sm:$0xf]
        %v1151 = vld [vmem:[%s1085 + $0x4] sm:$0xf]
        %v1152 = vld [vmem:[%s1085 + $0x8] sm:$0xf]
        %v1153 = vld [vmem:[%s1085 + $0xc] sm:$0xf]
        %v1154 = vld [vmem:[%s890] sm:$0x1]
        %v1156 = vperm.slane %v1154, 0
        %v1162 = vunpack.c.l.b16 %v1150
        %v1163 = vunpack.c.l.b16 %v1151
        %v1164 = vunpack.c.l.b16 %v1152
        %v1165 = vunpack.c.l.b16 %v1153
        %v1166 = vpack.c.b16 %v1163, %v1162
        %v1167 = vpack.c.b16 %v1165, %v1164
        %vm1170 = vcmask 261120
        %v1172 = vsel %vm1170, %v1149, 0
        %1174 = vmatpush.bf16.msra.mxu0 0
        %1175 = vmatpush.bf16.msra.mxu0 0
        %1176 = vmatpush.bf16.msra.mxu0 0
        %1177 = vmatpush.bf16.msra.mxu0 0
        %1178 = vmatpush.bf16.msra.mxu0 0
        %1179 = vmatpush.bf16.msra.mxu0 0
        %1180 = vmatpush.bf16.msra.mxu0 %v1167
        %1181 = vmatpush.bf16.msra.mxu0 %v1166
        %1182 = vmatmul.bf16.gmra.mxu0 %v1172
        %v1183 = vpop.f32.mrf.mxu0
        %v1184 = vadd.f32 %v1156, %v1183
        %v1185 = vpop.f32.mrf.mxu0
        %1186 = vdwg.mxu0
        %v1187 = vld [vmem:[%s876] sm:$0x1]
        %v1189 = vperm.slane %v1187, 0
        %1192 = vrot.lane.b32.xlu0 %v1184, 96
        %v1193 = vpop.permute.xlu0 %1192
        %vm1194 = vcmask 64512
        %v1195 = vsel %vm1194, %v1184, 0
        %v1197 = vsel %vm1194, %v1193, 0
        %1199 = vmatpush.xpose.msra.mxu0 0.0
        %1200 = vmatpush.xpose.msra.mxu0 0.0
        %1201 = vmatpush.xpose.msra.mxu0 0.0
        %1202 = vmatpush.xpose.msra.mxu0 0.0
        %1203 = vmatpush.xpose.msra.mxu0 0.0
        %1204 = vmatpush.xpose.msra.mxu0 0.0
        %1205 = vmatpush.xpose.msra.mxu0 0.0
        %1206 = vmatpush.xpose.msra.mxu0 0.0
        %1207 = vmatpush.xpose.msra.mxu0 0.0
        %1208 = vmatpush.xpose.msra.mxu0 0.0
        %1209 = vmatpush.xpose.msra.mxu0 0.0
        %1210 = vmatpush.xpose.msra.mxu0 0.0
        %1211 = vmatpush.xpose.msra.mxu0 0.0
        %1212 = vmatpush.xpose.msra.mxu0 0.0
        %1213 = vmatpush.xpose.msra.mxu0 0.0
        %1214 = vmatpush.xpose.msra.mxu0 %v1197
        %1215 = vmatmul.f32.gmra.mxu0 %v1195
        %v1216 = vpop.f32.mrf.mxu0
        %v1217 = vadd.f32 %v1189, %v1216
        %1218 = vdwg.mxu0
        %v1219 = vsel %vm1194, %v1217, -inf
        %1220 = vmax.xlane.f32.xlu0 %v1219
        %v1221 = vpop.xlane.xlu0 %1220
        %v1222 = vsub.f32 %v1217, %v1221
        %v1223 = vmul.f32 %v1222, 1.442695
        %v1224 = vpow.pop %v1223
        %v1225 = vsel %vm1194, %v1224, 0.0
        %1226 = vadd.xlane.f32.xlu0 %v1225
        %v1227 = vpop.xlane.xlu0 %1226
        %v1228 = vrcp.pop %v1227
        %v1229 = vmul.f32 %v1227, %v1228
        %v1230 = vsub.f32 1.0, %v1229
        %v1231 = vmul.f32 %v1228, %v1230
        %v1232 = vadd.f32 %v1228, %v1231
        %vm1233 = vweird.f32 %v1227
        %vm1234 = vweird.f32 %v1228
        %vm1235 = vmor %vm1233, %vm1234
        %v1236 = vsel %vm1235, %v1228, %v1232
        %v1237 = vand.u32 2147483647, %v1227
        %vm1238 = vcmp.eq.f32.partialorder %v1237, 8.507059e+37
        %v1239 = vand.u32 %v1227, 2147483648
        %v1240 = vor.u32 1.1754944e-38, %v1239
        %v1241 = vsel %vm1238, %v1240, %v1236
        %v1242 = vmul.f32 %v1224, %v1241
        %1243 = vrot.lane.b32.xlu0 %v1184, 64
        %v1244 = vpop.permute.xlu0 %1243
        %v1247 = vsel %vm1194, %v1242, 0
        %1249 = vmatpush.msra.mxu0 0.0
        %1250 = vmatpush.msra.mxu0 0.0
        %1251 = vmatpush.msra.mxu0 0.0
        %1252 = vmatpush.msra.mxu0 0.0
        %1253 = vmatpush.msra.mxu0 0.0
        %1254 = vmatpush.msra.mxu0 0.0
        %1255 = vmatpush.msra.mxu0 0.0
        %1256 = vmatpush.msra.mxu0 0.0
        %1257 = vmatpush.msra.mxu0 0.0
        %1258 = vmatpush.msra.mxu0 0.0
        %1259 = vmatpush.msra.mxu0 0.0
        %1260 = vmatpush.msra.mxu0 0.0
        %1261 = vmatpush.msra.mxu0 0.0
        %1262 = vmatpush.msra.mxu0 0.0
        %1263 = vmatpush.msra.mxu0 0.0
        %1264 = vmatpush.msra.mxu0 %v1244
        %1265 = vmatmul.f32.gmra.mxu0 %v1247
        %v1266 = vpop.f32.mrf.mxu0
        %v1267 = vadd.f32 0.0, %v1266
        %1268 = vdwg.mxu0
        %1269 = vst.msk [vmem:[#allocation3] sm:$0xff] %vm1194, %v1267
        %1270 = vrot.lane.b32.xlu0 %v1184, 120
        %v1271 = vpop.permute.xlu0 %1270
        %1272 = vrot.lane.b32.xlu0 %v1184, 88
        %v1273 = vpop.permute.xlu0 %1272
        %v1274 = vsel %vm1194, %v1271, 0
        %v1276 = vsel %vm1194, %v1273, 0
        %1278 = vmatpush.xpose.msra.mxu0 0.0
        %1279 = vmatpush.xpose.msra.mxu0 0.0
        %1280 = vmatpush.xpose.msra.mxu0 0.0
        %1281 = vmatpush.xpose.msra.mxu0 0.0
        %1282 = vmatpush.xpose.msra.mxu0 0.0
        %1283 = vmatpush.xpose.msra.mxu0 0.0
        %1284 = vmatpush.xpose.msra.mxu0 0.0
        %1285 = vmatpush.xpose.msra.mxu0 0.0
        %1286 = vmatpush.xpose.msra.mxu0 0.0
        %1287 = vmatpush.xpose.msra.mxu0 0.0
        %1288 = vmatpush.xpose.msra.mxu0 0.0
        %1289 = vmatpush.xpose.msra.mxu0 0.0
        %1290 = vmatpush.xpose.msra.mxu0 0.0
        %1291 = vmatpush.xpose.msra.mxu0 0.0
        %1292 = vmatpush.xpose.msra.mxu0 0.0
        %1293 = vmatpush.xpose.msra.mxu0 %v1276
        %1294 = vmatmul.f32.gmra.mxu0 %v1274
        %v1295 = vpop.f32.mrf.mxu0
        %v1296 = vadd.f32 %v1189, %v1295
        %1297 = vdwg.mxu0
        %v1298 = vsel %vm1194, %v1296, -inf
        %1299 = vmax.xlane.f32.xlu0 %v1298
        %v1300 = vpop.xlane.xlu0 %1299
        %v1301 = vsub.f32 %v1296, %v1300
        %v1302 = vmul.f32 %v1301, 1.442695
        %v1303 = vpow.pop %v1302
        %v1304 = vsel %vm1194, %v1303, 0.0
        %1305 = vadd.xlane.f32.xlu0 %v1304
        %v1306 = vpop.xlane.xlu0 %1305
        %v1307 = vrcp.pop %v1306
        %v1308 = vmul.f32 %v1306, %v1307
        %v1309 = vsub.f32 1.0, %v1308
        %v1310 = vmul.f32 %v1307, %v1309
        %v1311 = vadd.f32 %v1307, %v1310
        %vm1312 = vweird.f32 %v1306
        %vm1313 = vweird.f32 %v1307
        %vm1314 = vmor %vm1312, %vm1313
        %v1315 = vsel %vm1314, %v1307, %v1311
        %v1316 = vand.u32 2147483647, %v1306
        %vm1317 = vcmp.eq.f32.partialorder %v1316, 8.507059e+37
        %v1318 = vand.u32 %v1306, 2147483648
        %v1319 = vor.u32 1.1754944e-38, %v1318
        %v1320 = vsel %vm1317, %v1319, %v1315
        %v1321 = vmul.f32 %v1303, %v1320
        %1322 = vrot.lane.b32.xlu0 %v1184, 56
        %v1323 = vpop.permute.xlu0 %1322
        %v1326 = vsel %vm1194, %v1321, 0
        %1328 = vmatpush.msra.mxu0 0.0
        %1329 = vmatpush.msra.mxu0 0.0
        %1330 = vmatpush.msra.mxu0 0.0
        %1331 = vmatpush.msra.mxu0 0.0
        %1332 = vmatpush.msra.mxu0 0.0
        %1333 = vmatpush.msra.mxu0 0.0
        %1334 = vmatpush.msra.mxu0 0.0
        %1335 = vmatpush.msra.mxu0 0.0
        %1336 = vmatpush.msra.mxu0 0.0
        %1337 = vmatpush.msra.mxu0 0.0
        %1338 = vmatpush.msra.mxu0 0.0
        %1339 = vmatpush.msra.mxu0 0.0
        %1340 = vmatpush.msra.mxu0 0.0
        %1341 = vmatpush.msra.mxu0 0.0
        %1342 = vmatpush.msra.mxu0 0.0
        %1343 = vmatpush.msra.mxu0 %v1323
        %1344 = vmatmul.f32.gmra.mxu0 %v1326
        %v1345 = vpop.f32.mrf.mxu0
        %v1346 = vadd.f32 0.0, %v1345
        %1347 = vdwg.mxu0
        %1349 = vrot.lane.b32.xlu0 %v1346, 8
        %v1350 = vpop.permute.xlu0 %1349
        %vm1352 = vcmask 130112
        %1353 = vst.msk [vmem:[#allocation3] sm:$0xff] %vm1352, %v1350
        %1354 = vrot.lane.b32.xlu0 %v1184, 112
        %v1355 = vpop.permute.xlu0 %1354
        %1356 = vrot.lane.b32.xlu0 %v1184, 80
        %v1357 = vpop.permute.xlu0 %1356
        %v1358 = vsel %vm1194, %v1355, 0
        %v1360 = vsel %vm1194, %v1357, 0
        %1362 = vmatpush.xpose.msra.mxu0 0.0
        %1363 = vmatpush.xpose.msra.mxu0 0.0
        %1364 = vmatpush.xpose.msra.mxu0 0.0
        %1365 = vmatpush.xpose.msra.mxu0 0.0
        %1366 = vmatpush.xpose.msra.mxu0 0.0
        %1367 = vmatpush.xpose.msra.mxu0 0.0
        %1368 = vmatpush.xpose.msra.mxu0 0.0
        %1369 = vmatpush.xpose.msra.mxu0 0.0
        %1370 = vmatpush.xpose.msra.mxu0 0.0
        %1371 = vmatpush.xpose.msra.mxu0 0.0
        %1372 = vmatpush.xpose.msra.mxu0 0.0
        %1373 = vmatpush.xpose.msra.mxu0 0.0
        %1374 = vmatpush.xpose.msra.mxu0 0.0
        %1375 = vmatpush.xpose.msra.mxu0 0.0
        %1376 = vmatpush.xpose.msra.mxu0 0.0
        %1377 = vmatpush.xpose.msra.mxu0 %v1360
        %1378 = vmatmul.f32.gmra.mxu0 %v1358
        %v1379 = vpop.f32.mrf.mxu0
        %v1380 = vadd.f32 %v1189, %v1379
        %1381 = vdwg.mxu0
        %v1382 = vsel %vm1194, %v1380, -inf
        %1383 = vmax.xlane.f32.xlu0 %v1382
        %v1384 = vpop.xlane.xlu0 %1383
        %v1385 = vsub.f32 %v1380, %v1384
        %v1386 = vmul.f32 %v1385, 1.442695
        %v1387 = vpow.pop %v1386
        %v1388 = vsel %vm1194, %v1387, 0.0
        %1389 = vadd.xlane.f32.xlu0 %v1388
        %v1390 = vpop.xlane.xlu0 %1389
        %v1391 = vrcp.pop %v1390
        %v1392 = vmul.f32 %v1390, %v1391
        %v1393 = vsub.f32 1.0, %v1392
        %v1394 = vmul.f32 %v1391, %v1393
        %v1395 = vadd.f32 %v1391, %v1394
        %vm1396 = vweird.f32 %v1390
        %vm1397 = vweird.f32 %v1391
        %vm1398 = vmor %vm1396, %vm1397
        %v1399 = vsel %vm1398, %v1391, %v1395
        %v1400 = vand.u32 2147483647, %v1390
        %vm1401 = vcmp.eq.f32.partialorder %v1400, 8.507059e+37
        %v1402 = vand.u32 %v1390, 2147483648
        %v1403 = vor.u32 1.1754944e-38, %v1402
        %v1404 = vsel %vm1401, %v1403, %v1399
        %v1405 = vmul.f32 %v1387, %v1404
        %1406 = vrot.lane.b32.xlu0 %v1184, 48
        %v1407 = vpop.permute.xlu0 %1406
        %v1410 = vsel %vm1194, %v1405, 0
        %1412 = vmatpush.msra.mxu0 0.0
        %1413 = vmatpush.msra.mxu0 0.0
        %1414 = vmatpush.msra.mxu0 0.0
        %1415 = vmatpush.msra.mxu0 0.0
        %1416 = vmatpush.msra.mxu0 0.0
        %1417 = vmatpush.msra.mxu0 0.0
        %1418 = vmatpush.msra.mxu0 0.0
        %1419 = vmatpush.msra.mxu0 0.0
        %1420 = vmatpush.msra.mxu0 0.0
        %1421 = vmatpush.msra.mxu0 0.0
        %1422 = vmatpush.msra.mxu0 0.0
        %1423 = vmatpush.msra.mxu0 0.0
        %1424 = vmatpush.msra.mxu0 0.0
        %1425 = vmatpush.msra.mxu0 0.0
        %1426 = vmatpush.msra.mxu0 0.0
        %1427 = vmatpush.msra.mxu0 %v1407
        %1428 = vmatmul.f32.gmra.mxu0 %v1410
        %v1429 = vpop.f32.mrf.mxu0
        %v1430 = vadd.f32 0.0, %v1429
        %1431 = vdwg.mxu0
        %1433 = vrot.lane.b32.xlu0 %v1430, 16
        %v1434 = vpop.permute.xlu0 %1433
        %vm1436 = vcmask 195712
        %1437 = vst.msk [vmem:[#allocation3] sm:$0xff] %vm1436, %v1434
        %1438 = vrot.lane.b32.xlu0 %v1184, 104
        %v1439 = vpop.permute.xlu0 %1438
        %1440 = vrot.lane.b32.xlu0 %v1184, 72
        %v1441 = vpop.permute.xlu0 %1440
        %v1442 = vsel %vm1194, %v1439, 0
        %v1444 = vsel %vm1194, %v1441, 0
        %1446 = vmatpush.xpose.msra.mxu0 0.0
        %1447 = vmatpush.xpose.msra.mxu0 0.0
        %1448 = vmatpush.xpose.msra.mxu0 0.0
        %1449 = vmatpush.xpose.msra.mxu0 0.0
        %1450 = vmatpush.xpose.msra.mxu0 0.0
        %1451 = vmatpush.xpose.msra.mxu0 0.0
        %1452 = vmatpush.xpose.msra.mxu0 0.0
        %1453 = vmatpush.xpose.msra.mxu0 0.0
        %1454 = vmatpush.xpose.msra.mxu0 0.0
        %1455 = vmatpush.xpose.msra.mxu0 0.0
        %1456 = vmatpush.xpose.msra.mxu0 0.0
        %1457 = vmatpush.xpose.msra.mxu0 0.0
        %1458 = vmatpush.xpose.msra.mxu0 0.0
        %1459 = vmatpush.xpose.msra.mxu0 0.0
        %1460 = vmatpush.xpose.msra.mxu0 0.0
        %1461 = vmatpush.xpose.msra.mxu0 %v1444
        %1462 = vmatmul.f32.gmra.mxu0 %v1442
        %v1463 = vpop.f32.mrf.mxu0
        %v1464 = vadd.f32 %v1189, %v1463
        %1465 = vdwg.mxu0
        %v1466 = vsel %vm1194, %v1464, -inf
        %1467 = vmax.xlane.f32.xlu0 %v1466
        %v1468 = vpop.xlane.xlu0 %1467
        %v1469 = vsub.f32 %v1464, %v1468
        %v1470 = vmul.f32 %v1469, 1.442695
        %v1471 = vpow.pop %v1470
        %v1472 = vsel %vm1194, %v1471, 0.0
        %1473 = vadd.xlane.f32.xlu0 %v1472
        %v1474 = vpop.xlane.xlu0 %1473
        %v1475 = vrcp.pop %v1474
        %v1476 = vmul.f32 %v1474, %v1475
        %v1477 = vsub.f32 1.0, %v1476
        %v1478 = vmul.f32 %v1475, %v1477
        %v1479 = vadd.f32 %v1475, %v1478
        %vm1480 = vweird.f32 %v1474
        %vm1481 = vweird.f32 %v1475
        %vm1482 = vmor %vm1480, %vm1481
        %v1483 = vsel %vm1482, %v1475, %v1479
        %v1484 = vand.u32 2147483647, %v1474
        %vm1485 = vcmp.eq.f32.partialorder %v1484, 8.507059e+37
        %v1486 = vand.u32 %v1474, 2147483648
        %v1487 = vor.u32 1.1754944e-38, %v1486
        %v1488 = vsel %vm1485, %v1487, %v1483
        %v1489 = vmul.f32 %v1471, %v1488
        %1490 = vrot.lane.b32.xlu0 %v1184, 40
        %v1491 = vpop.permute.xlu0 %1490
        %v1494 = vsel %vm1194, %v1489, 0
        %1496 = vmatpush.msra.mxu0 0.0
        %1497 = vmatpush.msra.mxu0 0.0
        %1498 = vmatpush.msra.mxu0 0.0
        %1499 = vmatpush.msra.mxu0 0.0
        %1500 = vmatpush.msra.mxu0 0.0
        %1501 = vmatpush.msra.mxu0 0.0
        %1502 = vmatpush.msra.mxu0 0.0
        %1503 = vmatpush.msra.mxu0 0.0
        %1504 = vmatpush.msra.mxu0 0.0
        %1505 = vmatpush.msra.mxu0 0.0
        %1506 = vmatpush.msra.mxu0 0.0
        %1507 = vmatpush.msra.mxu0 0.0
        %1508 = vmatpush.msra.mxu0 0.0
        %1509 = vmatpush.msra.mxu0 0.0
        %1510 = vmatpush.msra.mxu0 0.0
        %1511 = vmatpush.msra.mxu0 %v1491
        %1512 = vmatmul.f32.gmra.mxu0 %v1494
        %v1513 = vpop.f32.mrf.mxu0
        %v1514 = vadd.f32 0.0, %v1513
        %1515 = vdwg.mxu0
        %1517 = vrot.lane.b32.xlu0 %v1514, 24
        %v1518 = vpop.permute.xlu0 %1517
        %vm1520 = vcmask 261312
        %1521 = vst.msk [vmem:[#allocation3] sm:$0xff] %vm1520, %v1518
        %v1522 = vld [vmem:[#allocation3] sm:$0xff]
        %v1523 = vpack.c.bf16 %v1522, %v1522
        %v1524 = vld [vmem:[%s1090] sm:$0xf]
        %v1525 = vld [vmem:[%s1090 + $0x4] sm:$0xf]
        %v1526 = vld [vmem:[%s1090 + $0x8] sm:$0xf]
        %v1527 = vld [vmem:[%s1090 + $0xc] sm:$0xf]
        %v1528 = vld [vmem:[%s899] sm:$0x1]
        %v1530 = vperm.slane %v1528, 0
        %v1536 = vunpack.c.l.b16 %v1524
        %v1537 = vunpack.c.l.b16 %v1525
        %v1538 = vunpack.c.l.b16 %v1526
        %v1539 = vunpack.c.l.b16 %v1527
        %v1540 = vpack.c.b16 %v1537, %v1536
        %v1541 = vpack.c.b16 %v1539, %v1538
        %v1545 = vsel %vm1170, %v1523, 0
        %1547 = vmatpush.bf16.msra.mxu0 0
        %1548 = vmatpush.bf16.msra.mxu0 0
        %1549 = vmatpush.bf16.msra.mxu0 0
        %1550 = vmatpush.bf16.msra.mxu0 0
        %1551 = vmatpush.bf16.msra.mxu0 0
        %1552 = vmatpush.bf16.msra.mxu0 0
        %1553 = vmatpush.bf16.msra.mxu0 %v1541
        %1554 = vmatpush.bf16.msra.mxu0 %v1540
        %1555 = vmatmul.bf16.gmra.mxu0 %v1545
        %v1556 = vpop.f32.mrf.mxu0
        %v1557 = vadd.f32 %v1530, %v1556
        %v1558 = vpop.f32.mrf.mxu0
        %1559 = vdwg.mxu0
        %v1560 = vadd.f32 %v1148, %v1557
        %v1561 = vld [vmem:[%s908] sm:$0x1]
        %v1562 = vld [vmem:[%s917] sm:$0x1]
        %v1563 = vsel %vm1170, %v1560, 0.0
        %1564 = vadd.xlane.f32.xlu0 %v1563
        %v1565 = vpop.xlane.xlu0 %1564
        %v1566 = vrcp.pop 32.0
        %v1567 = vmul.f32 32.0, %v1566
        %v1568 = vsub.f32 1.0, %v1567
        %v1569 = vmul.f32 %v1566, %v1568
        %v1570 = vadd.f32 %v1566, %v1569
        %vm1571 = vweird.f32 %v1566
        %v1572 = vsel %vm1571, %v1566, %v1570
        %v1573 = vmul.f32 %v1565, %v1572
        %v1574 = vsub.f32 %v1560, %v1573
        %v1575 = vmul.f32 %v1574, %v1574
        %v1576 = vsel %vm1170, %v1575, 0.0
        %1577 = vadd.xlane.f32.xlu0 %v1576
        %v1578 = vpop.xlane.xlu0 %1577
        %v1579 = vmul.f32 %v1578, %v1572
        %v1580 = vadd.f32 %v1579, 1e-12
        %v1581 = vrsqrt.pop %v1580
        %v1582 = vmul.f32 %v1581, %v1580
        %v1583 = vmul.f32 %v1582, %v1581
        %v1584 = vmul.f32 0.5, %v1583
        %v1585 = vsub.f32 1.5, %v1584
        %v1586 = vmul.f32 %v1581, %v1585
        %vm1587 = vweird.f32 %v1580
        %vm1588 = vweird.f32 %v1581
        %vm1589 = vmor %vm1587, %vm1588
        %v1590 = vsel %vm1589, %v1581, %v1586
        %v1591 = vmul.f32 %v1574, %v1590
        %v1593 = vperm.slane %v1561, 0
        %v1595 = vmul.f32 %v1591, %v1593
        %v1597 = vperm.slane %v1562, 0
        %v1599 = vadd.f32 %v1595, %v1597
        %v1600 = vpack.c.bf16 %v1599, %v1599
        %v1601 = vld [vmem:[%s1095] sm:$0xf]
        %v1602 = vld [vmem:[%s1095 + $0x4] sm:$0xf]
        %v1603 = vld [vmem:[%s1095 + $0x8] sm:$0xf]
        %v1604 = vld [vmem:[%s1095 + $0xc] sm:$0xf]
        %v1605 = vld [vmem:[%s926] sm:$0x1]
        %v1607 = vperm.slane %v1605, 0
        %v1613 = vunpack.c.l.b16 %v1601
        %v1614 = vunpack.c.l.b16 %v1602
        %v1615 = vunpack.c.l.b16 %v1603
        %v1616 = vunpack.c.l.b16 %v1604
        %v1617 = vpack.c.b16 %v1614, %v1613
        %v1618 = vpack.c.b16 %v1616, %v1615
        %v1622 = vsel %vm1170, %v1600, 0
        %1624 = vmatpush.bf16.msra.mxu0 0
        %1625 = vmatpush.bf16.msra.mxu0 0
        %1626 = vmatpush.bf16.msra.mxu0 0
        %1627 = vmatpush.bf16.msra.mxu0 0
        %1628 = vmatpush.bf16.msra.mxu0 0
        %1629 = vmatpush.bf16.msra.mxu0 0
        %1630 = vmatpush.bf16.msra.mxu0 %v1618
        %1631 = vmatpush.bf16.msra.mxu0 %v1617
        %1632 = vmatmul.bf16.gmra.mxu0 %v1622
        %v1633 = vpop.f32.mrf.mxu0
        %v1634 = vadd.f32 %v1607, %v1633
        %v1635 = vpop.f32.mrf.mxu0
        %1636 = vdwg.mxu0
        %v1637 = vmul.f32 %v1634, %v1634
        %v1638 = vmul.f32 %v1634, %v1637
        %v1639 = vmul.f32 %v1638, 0.044715
        %v1640 = vadd.f32 %v1634, %v1639
        %v1641 = vmul.f32 %v1640, 0.7978846
        %v1642 = vtanh.pop %v1641
        %v1643 = vadd.f32 %v1642, 1.0
        %v1644 = vmul.f32 %v1643, 0.5
        %v1645 = vmul.f32 %v1634, %v1644
        %v1646 = vpack.c.bf16 %v1645, %v1645
        %v1647 = vld [vmem:[%s1100] sm:$0xf]
        %v1648 = vld [vmem:[%s1100 + $0x4] sm:$0xf]
        %v1649 = vld [vmem:[%s1100 + $0x8] sm:$0xf]
        %v1650 = vld [vmem:[%s1100 + $0xc] sm:$0xf]
        %v1651 = vld [vmem:[%s1100 + $0x10] sm:$0xf]
        %v1652 = vld [vmem:[%s1100 + $0x14] sm:$0xf]
        %v1653 = vld [vmem:[%s1100 + $0x18] sm:$0xf]
        %v1654 = vld [vmem:[%s1100 + $0x1c] sm:$0xf]
        %v1655 = vld [vmem:[%s935] sm:$0x1]
        %v1657 = vperm.slane %v1655, 0
        %v1667 = vunpack.c.l.b16 %v1647
        %v1668 = vunpack.c.l.b16 %v1648
        %v1669 = vunpack.c.l.b16 %v1649
        %v1670 = vunpack.c.l.b16 %v1650
        %v1671 = vunpack.c.l.b16 %v1651
        %v1672 = vunpack.c.l.b16 %v1652
        %v1673 = vunpack.c.l.b16 %v1653
        %v1674 = vunpack.c.l.b16 %v1654
        %v1675 = vpack.c.b16 %v1668, %v1667
        %v1676 = vpack.c.b16 %v1670, %v1669
        %v1677 = vpack.c.b16 %v1672, %v1671
        %v1678 = vpack.c.b16 %v1674, %v1673
        %vm1683 = vcmask 523264
        %v1685 = vsel %vm1683, %v1646, 0
        %1687 = vmatpush.bf16.msra.mxu0 0
        %1688 = vmatpush.bf16.msra.mxu0 0
        %1689 = vmatpush.bf16.msra.mxu0 0
        %1690 = vmatpush.bf16.msra.mxu0 0
        %1691 = vmatpush.bf16.msra.mxu0 %v1678
        %1692 = vmatpush.bf16.msra.mxu0 %v1677
        %1693 = vmatpush.bf16.msra.mxu0 %v1676
        %1694 = vmatpush.bf16.msra.mxu0 %v1675
        %1695 = vmatmul.bf16.gmra.mxu0 %v1685
        %v1696 = vpop.f32.mrf.mxu0
        %v1697 = vadd.f32 %v1657, %v1696
        %v1698 = vpop.f32.mrf.mxu0
        %1699 = vdwg.mxu0
        %v1700 = vadd.f32 %v1599, %v1697
        %v1701 = vld [vmem:[%s944] sm:$0x1]
        %v1702 = vld [vmem:[%s953] sm:$0x1]
        %v1703 = vsel %vm1170, %v1700, 0.0
        %1704 = vadd.xlane.f32.xlu0 %v1703
        %v1705 = vpop.xlane.xlu0 %1704
        %v1706 = vmul.f32 %v1705, %v1572
        %v1707 = vsub.f32 %v1700, %v1706
        %v1708 = vmul.f32 %v1707, %v1707
        %v1709 = vsel %vm1170, %v1708, 0.0
        %1710 = vadd.xlane.f32.xlu0 %v1709
        %v1711 = vpop.xlane.xlu0 %1710
        %v1712 = vmul.f32 %v1711, %v1572
        %v1713 = vadd.f32 %v1712, 1e-12
        %v1714 = vrsqrt.pop %v1713
        %v1715 = vmul.f32 %v1714, %v1713
        %v1716 = vmul.f32 %v1715, %v1714
        %v1717 = vmul.f32 0.5, %v1716
        %v1718 = vsub.f32 1.5, %v1717
        %v1719 = vmul.f32 %v1714, %v1718
        %vm1720 = vweird.f32 %v1713
        %vm1721 = vweird.f32 %v1714
        %vm1722 = vmor %vm1720, %vm1721
        %v1723 = vsel %vm1722, %v1714, %v1719
        %v1724 = vmul.f32 %v1707, %v1723
        %v1726 = vperm.slane %v1701, 0
        %v1728 = vmul.f32 %v1724, %v1726
        %v1730 = vperm.slane %v1702, 0
        %v1732 = vadd.f32 %v1728, %v1730
        %1733 = vst.msk [vmem:[#allocation2] sm:$0xff] %vm1170, %v1732
        %p1734 = scmp.eq.s32.totalorder %s59, 1
        // Predicated region
        $region161: #{tpu_custom_call.1} parent=99 // pred_check
          %p1735 = pneg %p1734
        $region162: #{tpu_custom_call.1} parent=99 // pred_check_branch
          %1737 = sbr.rel (%p1735) target = $region164
        $region163: #{tpu_custom_call.1} parent=99 // pred_region
          %v1738 = vpack.c.bf16 %v1732, %v1732
          %v1739 = vld [vmem:[#allocation22] sm:$0xf]
          %v1740 = vld [vmem:[#allocation22 + $0x4] sm:$0xf]
          %v1741 = vld [vmem:[#allocation22 + $0x8] sm:$0xf]
          %v1742 = vld [vmem:[#allocation22 + $0xc] sm:$0xf]
          %v1743 = vld [vmem:[#allocation24] sm:$0x1]
          %v1748 = vunpack.c.l.b16 %v1739
          %v1749 = vunpack.c.l.b16 %v1740
          %v1750 = vunpack.c.l.b16 %v1741
          %v1751 = vunpack.c.l.b16 %v1742
          %v1752 = vpack.c.b16 %v1749, %v1748
          %v1753 = vpack.c.b16 %v1751, %v1750
          %v1757 = vsel %vm1170, %v1738, 0
          %1759 = vmatpush.bf16.msra.mxu0 0
          %1760 = vmatpush.bf16.msra.mxu0 0
          %1761 = vmatpush.bf16.msra.mxu0 0
          %1762 = vmatpush.bf16.msra.mxu0 0
          %1763 = vmatpush.bf16.msra.mxu0 0
          %1764 = vmatpush.bf16.msra.mxu0 0
          %1765 = vmatpush.bf16.msra.mxu0 %v1753
          %1766 = vmatpush.bf16.msra.mxu0 %v1752
          %1767 = vmatmul.bf16.gmra.mxu0 %v1757
          %v1768 = vpop.f32.mrf.mxu0
          %v1769 = vadd.f32 %v1743, %v1768
          %v1770 = vpop.f32.mrf.mxu0
          %1771 = vdwg.mxu0
          %v1772 = vtanh.pop %v1769
          %v1773 = vpack.c.bf16 %v1772, %v1772
          %v1774 = vld [vmem:[%s18] sm:$0xf]
          %v1775 = vld [vmem:[%s18 + $0x4] sm:$0xf]
          %v1776 = vld [vmem:[%s18 + $0x8] sm:$0xf]
          %v1777 = vld [vmem:[%s18 + $0xc] sm:$0xf]
          %v1778 = vld [vmem:[#allocation25] sm:$0x1]
          %v1783 = vunpack.c.l.b16 %v1774
          %v1784 = vunpack.c.l.b16 %v1775
          %v1785 = vunpack.c.l.b16 %v1776
          %v1786 = vunpack.c.l.b16 %v1777
          %v1787 = vpack.c.b16 %v1784, %v1783
          %v1788 = vpack.c.b16 %v1786, %v1785
          %v1792 = vsel %vm1170, %v1773, 0
          %1794 = vmatpush.bf16.msra.mxu0 0
          %1795 = vmatpush.bf16.msra.mxu0 0
          %1796 = vmatpush.bf16.msra.mxu0 0
          %1797 = vmatpush.bf16.msra.mxu0 0
          %1798 = vmatpush.bf16.msra.mxu0 0
          %1799 = vmatpush.bf16.msra.mxu0 0
          %1800 = vmatpush.bf16.msra.mxu0 %v1788
          %1801 = vmatpush.bf16.msra.mxu0 %v1787
          %1802 = vmatmul.bf16.gmra.mxu0 %v1792
          %v1803 = vpop.f32.mrf.mxu0
          %v1804 = vadd.f32 %v1778, %v1803
          %v1805 = vpop.f32.mrf.mxu0
          %1806 = vdwg.mxu0
          %v1807 = vmul.f32 %v1804, %v1804
          %vm1808 = vcmask 1040384
          %v1809 = vsel %vm1808, %v1807, 0.0
          %1810 = vadd.xlane.f32.xlu0 %v1809
          %v1811 = vpop.xlane.xlu0 %1810
          %v1812 = vmax.f32 %v1811, 1e-24
          %v1813 = vrsqrt.pop %v1812
          %v1814 = vmul.f32 %v1813, %v1812
          %v1815 = vmul.f32 %v1814, %v1813
          %v1816 = vmul.f32 0.5, %v1815
          %v1817 = vsub.f32 1.5, %v1816
          %v1818 = vmul.f32 %v1813, %v1817
          %vm1819 = vweird.f32 %v1812
          %vm1820 = vweird.f32 %v1813
          %vm1821 = vmor %vm1819, %vm1820
          %v1822 = vsel %vm1821, %v1813, %v1818
          %v1823 = vmul.f32 %v1804, %v1822
          %1824 = vst [vmem:[%s1080] sm:$0x1] %v1823
        $region164: #{tpu_custom_call.1} parent=99 // pred_fallthru
          _
        %s1825 = sand.u32 %s564, 1
        %s1826 = scalar_lea.sflag [#allocation6], %s1825
        %s1827 = sand.u32 %s564, 1
        %s1828 = scalar_lea.vmem [#allocation27], %s1827
        // Predicated region
        $region165: #{tpu_custom_call.1} parent=99 // pred_check
          %p1829 = pneg %p574
        $region166: #{tpu_custom_call.1} parent=99 // pred_check_branch
          %1831 = sbr.rel (%p1829) target = $region168
        $region167: #{tpu_custom_call.1} parent=99 // pred_region
          %1833 = vsyncadd %s1826, 0
          %s1834 = scalar_lea.hbm %s20, %s58
          %s1836 = sshll.u32 %s1828, 4
          %s1837 = int_to_ptr.vmem [resolvable:$true] %s1836
          %s1838 = sshll.u32 %s1834, 4
          %s1839 = int_to_ptr.hbm [resolvable:$true] %s1838
          %1841 = dma.vmem_to_hbm [thread:$0]  %s1837, 16, %s1839, %s1826
        $region168: #{tpu_custom_call.1} parent=99 // pred_fallthru
          _
      $region100: #{tpu_custom_call.1} parent=5 // pred_fallthru
        _
      %p1842 = scmp.le.s32.totalorder 2, %s49
      // Predicated region
      $region169: #{tpu_custom_call.1} parent=5 // pred_check
        %p1843 = pneg %p1842
      $region170: #{tpu_custom_call.1} parent=5 // pred_check_branch
        %1845 = sbr.rel (%p1843) target = $region172
      $region171: #{tpu_custom_call.1} parent=5 // pred_region
        %s1846 = ssub.s32 %s49, 2
        // Predicated region
        $region173: #{tpu_custom_call.1} parent=171 // pred_check
          %p1847 = pneg %p580
        $region174: #{tpu_custom_call.1} parent=171 // pred_check_branch
          %1849 = sbr.rel (%p1847) target = $region176
        $region175: #{tpu_custom_call.1} parent=171 // pred_region
          %s1850 = sand.u32 %s565, 1
          %s1851 = scalar_lea.sflag [#allocation6], %s1850
          %s1852 = sand.u32 %s565, 1
          %s1853 = scalar_lea.vmem [#allocation27], %s1852
          %1855 = dma.done %s1851, 16
        $region176: #{tpu_custom_call.1} parent=171 // pred_fallthru
          _
      $region172: #{tpu_custom_call.1} parent=5 // pred_fallthru
        _
    $region6: #{tpu_custom_call.1} parent=1 // loop_footer
      %s53 = sadd.s32 1, %s49
    $region7: #{tpu_custom_call.1} parent=1 // loop_footer_branch
      %48 = sbr.rel target = $region3
    $region8: #{tpu_custom_call.1} parent=1 // loop_exit
      _
    %1856 = vsyncpa [#allocation5], 1
    %s1857 = scalar_lea.sflag [#allocation5], 1
    %1858 = vsyncpa %s1857, 1
    %1859 = vsyncpa [#allocation8], 1
    %s1860 = scalar_lea.sflag [#allocation8], 1
    %1861 = vsyncpa %s1860, 1
    %1862 = vsyncpa [#allocation11], 1
    %s1863 = scalar_lea.sflag [#allocation11], 1
    %1864 = vsyncpa %s1863, 1
    %1865 = vsyncpa [#allocation14], 1
    %s1866 = scalar_lea.sflag [#allocation14], 1
    %1867 = vsyncpa %s1866, 1
    %1868 = vsyncpa [#allocation17], 1
    %s1869 = scalar_lea.sflag [#allocation17], 1
    %1870 = vsyncpa %s1869, 1
    %1871 = vsyncpa [#allocation20], 1
    %s1872 = scalar_lea.sflag [#allocation20], 1
    %1873 = vsyncpa %s1872, 1
    %1874 = vsyncpa [#allocation23], 1
    %1875 = vsyncpa [#allocation26], 1
    %1876 = vsyncpa [#allocation6], 1
    %s1877 = scalar_lea.sflag [#allocation6], 1
    %1878 = vsyncpa %s1877, 1

</llo_original>
